<compile_context>
chip_gen: v5e
topology: v5e:2x2
jax: 0.10.0
libtpu: 0.0.40
codegen_flags: <defaults>
</compile_context>

<pallas_src>
import numpy as np
import jax
import jax.numpy as jnp
from jax.experimental import pallas as pl
from jax.experimental.pallas import tpu as pltpu


def bottleneck_kernel(x_ref, w1_ref, b1_ref, w2_ref, b2_ref, w3_ref, b3_ref,
                      out_ref):
    # x_ref:  (H, W, Cin)      bf16  (full image for this batch element)
    # out_ref:(TILE_H, W, Cout) bf16 (one row tile)
    H, W, Cin = x_ref.shape
    TILE_H = out_ref.shape[0]
    Cw = w1_ref.shape[1]
    Cout = w3_ref.shape[1]

    h = pl.program_id(1)
    n_h = pl.num_programs(1)
    row0 = pl.multiple_of(h * TILE_H, TILE_H)

    # ---- gather central rows + 1-row halo (clamped; masked below) ----
    x_mid = x_ref[pl.ds(row0, TILE_H)]                         # (TILE_H, W, Cin)
    top_idx = jnp.maximum(row0 - 1, 0)
    bot_idx = jnp.minimum(row0 + TILE_H, H - 1)
    x_top = x_ref[pl.ds(top_idx, 1)]                           # (1, W, Cin)
    x_bot = x_ref[pl.ds(bot_idx, 1)]                           # (1, W, Cin)
    x_all = jnp.concatenate([x_top, x_mid, x_bot], axis=0)     # (TILE_H+2, W, Cin)

    # ---- conv1 (1x1, BN scale folded into w1) + bias + ReLU ----
    t1 = jnp.dot(x_all.reshape((TILE_H + 2) * W, Cin), w1_ref[...],
                 preferred_element_type=jnp.float32)
    t1 = jnp.maximum(t1 + b1_ref[...], 0.0)
    t1 = t1.reshape(TILE_H + 2, W, Cw)

    # Zero the halo rows that fall outside the image: conv2's pad=1 zero-pads
    # its *input* (post bn1/relu activations), so those rows must be exact 0.
    row_idx = jax.lax.broadcasted_iota(jnp.int32, (TILE_H + 2, 1, 1), 0)
    keep = jnp.logical_and(
        jnp.logical_or(row_idx != 0, h > 0),
        jnp.logical_or(row_idx != TILE_H + 1, h + 1 < n_h))
    t1_bf = jnp.where(keep, t1, 0.0).astype(jnp.bfloat16)      # bf16 taps

    # ---- conv2 (3x3, stride 1, pad 1) as 3 accumulating K=3*Cw matmuls ----
    # Pad W once (bf16), then each tap is a static slice of the padded value.
    zcol = jnp.zeros((TILE_H + 2, 1, Cw), jnp.bfloat16)
    t1_pad = jnp.concatenate([zcol, t1_bf, zcol], axis=1)      # (TILE_H+2, W+2, Cw)

    acc = jnp.zeros((TILE_H * W, Cw), jnp.float32)
    for ky in range(3):                                        # static unroll
        slab = t1_pad[ky:ky + TILE_H]                          # (TILE_H, W+2, Cw)
        tap = jnp.concatenate(
            [slab[:, 0:W], slab[:, 1:W + 1], slab[:, 2:W + 2]],
            axis=-1)                                           # (TILE_H, W, 3*Cw) bf16
        acc = acc + jnp.dot(tap.reshape(TILE_H * W, 3 * Cw),
                            w2_ref[ky * 3 * Cw:(ky + 1) * 3 * Cw, :],
                            preferred_element_type=jnp.float32)
    t2 = jnp.maximum(acc + b2_ref[...], 0.0)                   # (TILE_H*W, Cw) f32

    # ---- conv3 (1x1) + bias + residual (f32) + ReLU ----
    t3 = jnp.dot(t2.astype(jnp.bfloat16), w3_ref[...],
                 preferred_element_type=jnp.float32)           # (TILE_H*W, Cout)
    t3 = t3 + b3_ref[...]
    resid = x_mid.reshape(TILE_H * W, Cin).astype(jnp.float32)
    t3 = jnp.maximum(t3 + resid, 0.0)
    out_ref[...] = t3.reshape(TILE_H, W, Cout).astype(out_ref.dtype)


def bottleneck_forward(x_nhwc, w1, b1, w2col, b2, w3, b3, *, tile_h=None):
    """x_nhwc: (N, H, W, Cin) bf16.  Returns (N, H, W, Cout) bf16.

    w1: (Cin, width) bf16, w2col: (9*width, width) bf16 (rows ordered
    (ky, kx, ci)), w3: (width, Cout) bf16 — BN scales pre-folded into the
    weight columns; b*: (1, C) float32 folded BN biases.
    """
    N, H, W, Cin = x_nhwc.shape
    Cw = w1.shape[1]
    K2 = w2col.shape[0]
    Cout = w3.shape[1]

    if tile_h is None:
        tile_h = min(8, H)
    assert H % tile_h == 0, (H, tile_h)
    nh = H // tile_h

    out = pl.pallas_call(
        bottleneck_kernel,
        out_shape=jax.ShapeDtypeStruct((N, H, W, Cout), jnp.bfloat16),
        grid_spec=pltpu.PrefetchScalarGridSpec(
            num_scalar_prefetch=0,
            grid=(N, nh),
            in_specs=[
                # Full image stays resident across the row-tile axis; the
                # kernel slices TILE_H (+halo) rows with pl.ds.
                pl.BlockSpec((pl.Squeezed(), H, W, Cin),
                             lambda n, h: (n, 0, 0, 0)),
                pl.BlockSpec((Cin, Cw), lambda n, h: (0, 0)),
                pl.BlockSpec((1, Cw), lambda n, h: (0, 0)),
                pl.BlockSpec((K2, Cw), lambda n, h: (0, 0)),
                pl.BlockSpec((1, Cw), lambda n, h: (0, 0)),
                pl.BlockSpec((Cw, Cout), lambda n, h: (0, 0)),
                pl.BlockSpec((1, Cout), lambda n, h: (0, 0)),
            ],
            out_specs=pl.BlockSpec((pl.Squeezed(), tile_h, W, Cout),
                                   lambda n, h: (n, h, 0, 0)),
        ),
        compiler_params=pltpu.CompilerParams(
            dimension_semantics=("parallel", "parallel"),
            vmem_limit_bytes=48 * 1024 * 1024),
    )(x_nhwc, w1, b1, w2col, b2, w3, b3)
    return out


def fold_bn(gamma, beta, mean, var, eps=1e-5):
    scale = gamma / jnp.sqrt(var + eps)
    bias = beta - mean * scale
    return scale[None, :], bias[None, :]


def reference_forward(x_nchw, conv1_w, bn1, conv2_w, bn2, conv3_w, bn3):
    """Pure-JAX f32 reference (NHWC convs, inference-mode BN)."""
    x = jnp.transpose(x_nchw, (0, 2, 3, 1))

    def bn(x, p):
        g, b, m, v = p
        return (x - m) / jnp.sqrt(v + 1e-5) * g + b

    def conv(x, w_oihw, pad):
        w_hwio = jnp.transpose(w_oihw, (2, 3, 1, 0))
        return jax.lax.conv_general_dilated(
            x, w_hwio, (1, 1), pad,
            dimension_numbers=('NHWC', 'HWIO', 'NHWC'))

    out = jax.nn.relu(bn(conv(x, conv1_w, 'VALID'), bn1))
    out = jax.nn.relu(bn(conv(out, conv2_w, [(1, 1), (1, 1)]), bn2))
    out = bn(conv(out, conv3_w, 'VALID'), bn3)
    out = jax.nn.relu(out + x)
    return jnp.transpose(out, (0, 3, 1, 2))


if __name__ == "__main__":
    # Small shapes consistent with the module: inplanes = planes * 4 so the
    # identity path is valid without a downsample.
    N, planes, H, W = 2, 4, 16, 16
    inplanes = planes * 4          # 16
    width = planes                 # base_width=64, groups=1 -> width = planes
    cout = planes * 4              # 16

    key = jax.random.PRNGKey(0)
    ks = jax.random.split(key, 16)

    x = jax.random.normal(ks[0], (N, inplanes, H, W), jnp.float32)

    # PyTorch-layout (OIHW) conv weights, deterministic init.
    conv1_w = jax.random.normal(ks[1], (width, inplanes, 1, 1), jnp.float32) * 0.1
    conv2_w = jax.random.normal(ks[2], (width, width, 3, 3), jnp.float32) * 0.1
    conv3_w = jax.random.normal(ks[3], (cout, width, 1, 1), jnp.float32) * 0.1

    def make_bn(k, c):
        k1, k2, k3, k4 = jax.random.split(k, 4)
        gamma = jax.random.uniform(k1, (c,), jnp.float32, 0.5, 1.5)
        beta = jax.random.normal(k2, (c,), jnp.float32) * 0.1
        mean = jax.random.normal(k3, (c,), jnp.float32) * 0.1
        var = jax.random.uniform(k4, (c,), jnp.float32, 0.5, 1.5)
        return gamma, beta, mean, var

    bn1 = make_bn(ks[4], width)
    bn2 = make_bn(ks[5], width)
    bn3 = make_bn(ks[6], cout)

    # One-time (constant-weight) kernel-layout prep:
    #   1x1 convs as (Cin, Cout) matrices, 3x3 conv flattened to
    #   (9*width, width) with rows ordered (ky, kx, ci); BN scales folded
    #   into the bf16 weight columns, BN biases kept as f32 (1, C).
    s1, b1 = fold_bn(*bn1)
    s2, b2 = fold_bn(*bn2)
    s3, b3 = fold_bn(*bn3)
    w1 = (jnp.transpose(conv1_w[:, :, 0, 0], (1, 0)) * s1).astype(jnp.bfloat16)
    w2col = (jnp.transpose(conv2_w, (2, 3, 1, 0)).reshape(9 * width, width)
             * s2).astype(jnp.bfloat16)
    w3 = (jnp.transpose(conv3_w[:, :, 0, 0], (1, 0)) * s3).astype(jnp.bfloat16)

    # Activations at the HBM boundary are NHWC bf16 (one-time conversion here;
    # in a real network they would already be in this layout/dtype).
    x_nhwc = jnp.transpose(x, (0, 2, 3, 1)).astype(jnp.bfloat16)

    out_nhwc = bottleneck_forward(x_nhwc, w1, b1, w2col, b2, w3, b3)
    out_nhwc = jax.block_until_ready(out_nhwc)
    out = jnp.transpose(out_nhwc.astype(jnp.float32), (0, 3, 1, 2))

    ref = jax.block_until_ready(
        reference_forward(x, conv1_w, bn1, conv2_w, bn2, conv3_w, bn3))

    assert out.shape == (N, cout, H, W), out.shape
    # bf16 activations/weights (f32 accumulation) and bf16 output vs. the
    # full-f32 reference: tolerance loosened accordingly.
    err = np.max(np.abs(np.asarray(out) - np.asarray(ref)))
    assert np.allclose(np.asarray(out), np.asarray(ref),
                       rtol=1e-1, atol=1e-1), err

    print("KERNEL_OK")
</pallas_src>

<mosaic_0001>
module attributes {stable_mosaic.version = 11 : i64} {
  func.func @bottleneck_kernel(%arg0: i32, %arg1: i32, %arg2: memref<1x16x16x16xbf16, #tpu.memory_space<vmem>>, %arg3: memref<16x4xbf16, #tpu.memory_space<vmem>>, %arg4: memref<1x4xf32, #tpu.memory_space<vmem>>, %arg5: memref<36x4xbf16, #tpu.memory_space<vmem>>, %arg6: memref<1x4xf32, #tpu.memory_space<vmem>>, %arg7: memref<4x16xbf16, #tpu.memory_space<vmem>>, %arg8: memref<1x16xf32, #tpu.memory_space<vmem>>, %arg9: memref<1x8x16x16xbf16, #tpu.memory_space<vmem>>) attributes {dimension_semantics = [#tpu.dimension_semantics<parallel>, #tpu.dimension_semantics<parallel>], iteration_bounds = array<i64: 2, 2>, scalar_prefetch = 0 : i64, scratch_operands = 0 : i64, tpu.core_type = #tpu.core_type<tc>, window_params = [{transform_indices = @transform_0, window_bounds = array<i64: 1, 16, 16, 16>}, {pipeline_mode = #tpu.pipeline_mode<synchronous>, transform_indices = @transform_1, window_bounds = array<i64: 16, 4>}, {pipeline_mode = #tpu.pipeline_mode<synchronous>, transform_indices = @transform_2, window_bounds = array<i64: 1, 4>}, {pipeline_mode = #tpu.pipeline_mode<synchronous>, transform_indices = @transform_3, window_bounds = array<i64: 36, 4>}, {pipeline_mode = #tpu.pipeline_mode<synchronous>, transform_indices = @transform_4, window_bounds = array<i64: 1, 4>}, {pipeline_mode = #tpu.pipeline_mode<synchronous>, transform_indices = @transform_5, window_bounds = array<i64: 4, 16>}, {pipeline_mode = #tpu.pipeline_mode<synchronous>, transform_indices = @transform_6, window_bounds = array<i64: 1, 16>}, {transform_indices = @transform_7, window_bounds = array<i64: 1, 8, 16, 16>}]} {
    %c8_i32 = arith.constant 8 : i32
    %0 = arith.muli %arg1, %c8_i32 : i32
    %1 = tpu.assume_multiple %0, 8 : i32
    %c0 = arith.constant 0 : index
    %2 = arith.index_cast %1 : i32 to index
    %c0_0 = arith.constant 0 : index
    %c0_1 = arith.constant 0 : index
    %3 = vector.load %arg2[%c0, %2, %c0_0, %c0_1] : memref<1x16x16x16xbf16, #tpu.memory_space<vmem>>, vector<1x8x16x16xbf16>
    %4 = vector.shape_cast %3 : vector<1x8x16x16xbf16> to vector<8x16x16xbf16>
    %c1_i32 = arith.constant 1 : i32
    %5 = arith.subi %1, %c1_i32 : i32
    %c0_i32 = arith.constant 0 : i32
    %6 = arith.maxsi %5, %c0_i32 : i32
    %c8_i32_2 = arith.constant 8 : i32
    %7 = arith.addi %1, %c8_i32_2 : i32
    %c15_i32 = arith.constant 15 : i32
    %8 = arith.minsi %7, %c15_i32 : i32
    %c0_3 = arith.constant 0 : index
    %9 = arith.index_cast %6 : i32 to index
    %c0_4 = arith.constant 0 : index
    %c0_5 = arith.constant 0 : index
    %10 = vector.load %arg2[%c0_3, %9, %c0_4, %c0_5] : memref<1x16x16x16xbf16, #tpu.memory_space<vmem>>, vector<1x1x16x16xbf16>
    %11 = vector.shape_cast %10 : vector<1x1x16x16xbf16> to vector<1x16x16xbf16>
    %c0_6 = arith.constant 0 : index
    %12 = arith.index_cast %8 : i32 to index
    %c0_7 = arith.constant 0 : index
    %c0_8 = arith.constant 0 : index
    %13 = vector.load %arg2[%c0_6, %12, %c0_7, %c0_8] : memref<1x16x16x16xbf16, #tpu.memory_space<vmem>>, vector<1x1x16x16xbf16>
    %14 = vector.shape_cast %13 : vector<1x1x16x16xbf16> to vector<1x16x16xbf16>
    %15 = tpu.concatenate %11, %4, %14 in 0 : vector<1x16x16xbf16>, vector<8x16x16xbf16>, vector<1x16x16xbf16> -> vector<10x16x16xbf16>
    %16 = vector.shape_cast %15 : vector<10x16x16xbf16> to vector<160x16xbf16>
    %c0_9 = arith.constant 0 : index
    %c0_10 = arith.constant 0 : index
    %17 = vector.load %arg3[%c0_9, %c0_10] : memref<16x4xbf16, #tpu.memory_space<vmem>>, vector<16x4xbf16>
    %cst = arith.constant dense<0.000000e+00> : vector<160x4xf32>
    %18 = tpu.matmul %16, %17, %cst {dimension_numbers = #tpu.dot_dimension_numbers<[1], [0], [0], [1], [0, 0, 1, 1], [], []>} : vector<160x16xbf16>, vector<16x4xbf16>, vector<160x4xf32> -> vector<160x4xf32>
    %c0_11 = arith.constant 0 : index
    %c0_12 = arith.constant 0 : index
    %19 = vector.load %arg4[%c0_11, %c0_12] : memref<1x4xf32, #tpu.memory_space<vmem>>, vector<1x4xf32>
    %20 = vector.broadcast %19 : vector<1x4xf32> to vector<160x4xf32>
    %21 = arith.addf %18, %20 : vector<160x4xf32>
    %cst_13 = arith.constant 0.000000e+00 : f32
    %22 = vector.broadcast %cst_13 : f32 to vector<160x4xf32>
    %23 = arith.maximumf %21, %22 : vector<160x4xf32>
    %24 = vector.shape_cast %23 : vector<160x4xf32> to vector<10x16x4xf32>
    %25 = tpu.iota {dimensions = array<i32: 0>} : vector<10x1x1xi32>
    %c0_i32_14 = arith.constant 0 : i32
    %26 = vector.broadcast %c0_i32_14 : i32 to vector<10x1x1xi32>
    %27 = arith.cmpi ne, %25, %26 : vector<10x1x1xi32>
    %c0_i32_15 = arith.constant 0 : i32
    %28 = arith.cmpi sgt, %arg1, %c0_i32_15 : i32
    %29 = vector.broadcast %28 : i1 to vector<10x1x1xi1>
    %30 = arith.ori %27, %29 : vector<10x1x1xi1>
    %c9_i32 = arith.constant 9 : i32
    %31 = vector.broadcast %c9_i32 : i32 to vector<10x1x1xi32>
    %32 = arith.cmpi ne, %25, %31 : vector<10x1x1xi32>
    %c1_i32_16 = arith.constant 1 : i32
    %33 = arith.addi %arg1, %c1_i32_16 : i32
    %c2_i32 = arith.constant 2 : i32
    %34 = arith.cmpi slt, %33, %c2_i32 : i32
    %35 = vector.broadcast %34 : i1 to vector<10x1x1xi1>
    %36 = arith.ori %32, %35 : vector<10x1x1xi1>
    %37 = arith.andi %30, %36 : vector<10x1x1xi1>
    %cst_17 = arith.constant 0.000000e+00 : f32
    %38 = vector.shape_cast %37 : vector<10x1x1xi1> to vector<10x1x1xi1>
    %39 = vector.broadcast %38 : vector<10x1x1xi1> to vector<10x16x4xi1>
    %40 = vector.broadcast %cst_17 : f32 to vector<10x16x4xf32>
    %41 = arith.select %39, %24, %40 : vector<10x16x4xi1>, vector<10x16x4xf32>
    %42 = arith.truncf %41 : vector<10x16x4xf32> to vector<10x16x4xbf16>
    %cst_18 = arith.constant 0.000000e+00 : bf16
    %43 = vector.broadcast %cst_18 : bf16 to vector<10x1x4xbf16>
    %44 = tpu.concatenate %43, %42, %43 in 1 : vector<10x1x4xbf16>, vector<10x16x4xbf16>, vector<10x1x4xbf16> -> vector<10x18x4xbf16>
    %cst_19 = arith.constant 0.000000e+00 : f32
    %45 = vector.broadcast %cst_19 : f32 to vector<128x4xf32>
    %46 = vector.extract_strided_slice %44 {offsets = [0, 0, 0], sizes = [8, 18, 4], strides = [1, 1, 1]} : vector<10x18x4xbf16> to vector<8x18x4xbf16>
    %47 = vector.extract_strided_slice %46 {offsets = [0, 0, 0], sizes = [8, 16, 4], strides = [1, 1, 1]} : vector<8x18x4xbf16> to vector<8x16x4xbf16>
    %48 = vector.extract_strided_slice %46 {offsets = [0, 1, 0], sizes = [8, 16, 4], strides = [1, 1, 1]} : vector<8x18x4xbf16> to vector<8x16x4xbf16>
    %49 = vector.extract_strided_slice %46 {offsets = [0, 2, 0], sizes = [8, 16, 4], strides = [1, 1, 1]} : vector<8x18x4xbf16> to vector<8x16x4xbf16>
    %50 = tpu.concatenate %47, %48, %49 in 2 : vector<8x16x4xbf16>, vector<8x16x4xbf16>, vector<8x16x4xbf16> -> vector<8x16x12xbf16>
    %51 = vector.shape_cast %50 : vector<8x16x12xbf16> to vector<128x12xbf16>
    %c0_20 = arith.constant 0 : index
    %c0_21 = arith.constant 0 : index
    %52 = vector.load %arg5[%c0_20, %c0_21] : memref<36x4xbf16, #tpu.memory_space<vmem>>, vector<12x4xbf16>
    %cst_22 = arith.constant dense<0.000000e+00> : vector<128x4xf32>
    %53 = tpu.matmul %51, %52, %cst_22 {dimension_numbers = #tpu.dot_dimension_numbers<[1], [0], [0], [1], [0, 0, 1, 1], [], []>} : vector<128x12xbf16>, vector<12x4xbf16>, vector<128x4xf32> -> vector<128x4xf32>
    %54 = arith.addf %45, %53 : vector<128x4xf32>
    %55 = vector.extract_strided_slice %44 {offsets = [1, 0, 0], sizes = [8, 18, 4], strides = [1, 1, 1]} : vector<10x18x4xbf16> to vector<8x18x4xbf16>
    %56 = vector.extract_strided_slice %55 {offsets = [0, 0, 0], sizes = [8, 16, 4], strides = [1, 1, 1]} : vector<8x18x4xbf16> to vector<8x16x4xbf16>
    %57 = vector.extract_strided_slice %55 {offsets = [0, 1, 0], sizes = [8, 16, 4], strides = [1, 1, 1]} : vector<8x18x4xbf16> to vector<8x16x4xbf16>
    %58 = vector.extract_strided_slice %55 {offsets = [0, 2, 0], sizes = [8, 16, 4], strides = [1, 1, 1]} : vector<8x18x4xbf16> to vector<8x16x4xbf16>
    %59 = tpu.concatenate %56, %57, %58 in 2 : vector<8x16x4xbf16>, vector<8x16x4xbf16>, vector<8x16x4xbf16> -> vector<8x16x12xbf16>
    %60 = vector.shape_cast %59 : vector<8x16x12xbf16> to vector<128x12xbf16>
    %c12 = arith.constant 12 : index
    %c0_23 = arith.constant 0 : index
    %61 = vector.load %arg5[%c12, %c0_23] : memref<36x4xbf16, #tpu.memory_space<vmem>>, vector<12x4xbf16>
    %cst_24 = arith.constant dense<0.000000e+00> : vector<128x4xf32>
    %62 = tpu.matmul %60, %61, %cst_24 {dimension_numbers = #tpu.dot_dimension_numbers<[1], [0], [0], [1], [0, 0, 1, 1], [], []>} : vector<128x12xbf16>, vector<12x4xbf16>, vector<128x4xf32> -> vector<128x4xf32>
    %63 = arith.addf %54, %62 : vector<128x4xf32>
    %64 = vector.extract_strided_slice %44 {offsets = [2, 0, 0], sizes = [8, 18, 4], strides = [1, 1, 1]} : vector<10x18x4xbf16> to vector<8x18x4xbf16>
    %65 = vector.extract_strided_slice %64 {offsets = [0, 0, 0], sizes = [8, 16, 4], strides = [1, 1, 1]} : vector<8x18x4xbf16> to vector<8x16x4xbf16>
    %66 = vector.extract_strided_slice %64 {offsets = [0, 1, 0], sizes = [8, 16, 4], strides = [1, 1, 1]} : vector<8x18x4xbf16> to vector<8x16x4xbf16>
    %67 = vector.extract_strided_slice %64 {offsets = [0, 2, 0], sizes = [8, 16, 4], strides = [1, 1, 1]} : vector<8x18x4xbf16> to vector<8x16x4xbf16>
    %68 = tpu.concatenate %65, %66, %67 in 2 : vector<8x16x4xbf16>, vector<8x16x4xbf16>, vector<8x16x4xbf16> -> vector<8x16x12xbf16>
    %69 = vector.shape_cast %68 : vector<8x16x12xbf16> to vector<128x12xbf16>
    %c24 = arith.constant 24 : index
    %c0_25 = arith.constant 0 : index
    %70 = vector.load %arg5[%c24, %c0_25] : memref<36x4xbf16, #tpu.memory_space<vmem>>, vector<12x4xbf16>
    %cst_26 = arith.constant dense<0.000000e+00> : vector<128x4xf32>
    %71 = tpu.matmul %69, %70, %cst_26 {dimension_numbers = #tpu.dot_dimension_numbers<[1], [0], [0], [1], [0, 0, 1, 1], [], []>} : vector<128x12xbf16>, vector<12x4xbf16>, vector<128x4xf32> -> vector<128x4xf32>
    %72 = arith.addf %63, %71 : vector<128x4xf32>
    %c0_27 = arith.constant 0 : index
    %c0_28 = arith.constant 0 : index
    %73 = vector.load %arg6[%c0_27, %c0_28] : memref<1x4xf32, #tpu.memory_space<vmem>>, vector<1x4xf32>
    %74 = vector.broadcast %73 : vector<1x4xf32> to vector<128x4xf32>
    %75 = arith.addf %72, %74 : vector<128x4xf32>
    %cst_29 = arith.constant 0.000000e+00 : f32
    %76 = vector.broadcast %cst_29 : f32 to vector<128x4xf32>
    %77 = arith.maximumf %75, %76 : vector<128x4xf32>
    %78 = arith.truncf %77 : vector<128x4xf32> to vector<128x4xbf16>
    %c0_30 = arith.constant 0 : index
    %c0_31 = arith.constant 0 : index
    %79 = vector.load %arg7[%c0_30, %c0_31] : memref<4x16xbf16, #tpu.memory_space<vmem>>, vector<4x16xbf16>
    %cst_32 = arith.constant dense<0.000000e+00> : vector<128x16xf32>
    %80 = tpu.matmul %78, %79, %cst_32 {dimension_numbers = #tpu.dot_dimension_numbers<[1], [0], [0], [1], [0, 0, 1, 1], [], []>} : vector<128x4xbf16>, vector<4x16xbf16>, vector<128x16xf32> -> vector<128x16xf32>
    %c0_33 = arith.constant 0 : index
    %c0_34 = arith.constant 0 : index
    %81 = vector.load %arg8[%c0_33, %c0_34] : memref<1x16xf32, #tpu.memory_space<vmem>>, vector<1x16xf32>
    %82 = vector.broadcast %81 : vector<1x16xf32> to vector<128x16xf32>
    %83 = arith.addf %80, %82 : vector<128x16xf32>
    %84 = vector.shape_cast %4 : vector<8x16x16xbf16> to vector<128x16xbf16>
    %85 = arith.extf %84 : vector<128x16xbf16> to vector<128x16xf32>
    %86 = arith.addf %83, %85 : vector<128x16xf32>
    %cst_35 = arith.constant 0.000000e+00 : f32
    %87 = vector.broadcast %cst_35 : f32 to vector<128x16xf32>
    %88 = arith.maximumf %86, %87 : vector<128x16xf32>
    %89 = vector.shape_cast %88 : vector<128x16xf32> to vector<8x16x16xf32>
    %90 = arith.truncf %89 : vector<8x16x16xf32> to vector<8x16x16xbf16>
    %c0_36 = arith.constant 0 : index
    %c0_37 = arith.constant 0 : index
    %c0_38 = arith.constant 0 : index
    %c0_39 = arith.constant 0 : index
    %91 = vector.load %arg9[%c0_36, %c0_37, %c0_38, %c0_39] : memref<1x8x16x16xbf16, #tpu.memory_space<vmem>>, vector<1x8x16x16xbf16>
    %92 = vector.shape_cast %91 : vector<1x8x16x16xbf16> to vector<8x16x16xbf16>
    %93 = vector.shape_cast %90 : vector<8x16x16xbf16> to vector<1x8x16x16xbf16>
    tpu.vector_store %arg9[%c0_36, %c0_37, %c0_38, %c0_39], %93 {strides = array<i32>} : memref<1x8x16x16xbf16, #tpu.memory_space<vmem>>, vector<1x8x16x16xbf16>,
    return
  }
  func.func @transform_0(%arg0: i32, %arg1: i32) -> (i32, i32, i32, i32) {
    %c0_i32 = arith.constant 0 : i32
    %c0_i32_0 = arith.constant 0 : i32
    %c0_i32_1 = arith.constant 0 : i32
    %c0_i32_2 = arith.constant 0 : i32
    return %arg0, %c0_i32, %c0_i32_0, %c0_i32_1 : i32, i32, i32, i32
  }
  func.func @transform_1(%arg0: i32, %arg1: i32) -> (i32, i32) {
    %c0_i32 = arith.constant 0 : i32
    %c0_i32_0 = arith.constant 0 : i32
    %c0_i32_1 = arith.constant 0 : i32
    return %c0_i32, %c0_i32_0 : i32, i32
  }
  func.func @transform_2(%arg0: i32, %arg1: i32) -> (i32, i32) {
    %c0_i32 = arith.constant 0 : i32
    %c0_i32_0 = arith.constant 0 : i32
    %c0_i32_1 = arith.constant 0 : i32
    return %c0_i32, %c0_i32_0 : i32, i32
  }
  func.func @transform_3(%arg0: i32, %arg1: i32) -> (i32, i32) {
    %c0_i32 = arith.constant 0 : i32
    %c0_i32_0 = arith.constant 0 : i32
    %c0_i32_1 = arith.constant 0 : i32
    return %c0_i32, %c0_i32_0 : i32, i32
  }
  func.func @transform_4(%arg0: i32, %arg1: i32) -> (i32, i32) {
    %c0_i32 = arith.constant 0 : i32
    %c0_i32_0 = arith.constant 0 : i32
    %c0_i32_1 = arith.constant 0 : i32
    return %c0_i32, %c0_i32_0 : i32, i32
  }
  func.func @transform_5(%arg0: i32, %arg1: i32) -> (i32, i32) {
    %c0_i32 = arith.constant 0 : i32
    %c0_i32_0 = arith.constant 0 : i32
    %c0_i32_1 = arith.constant 0 : i32
    return %c0_i32, %c0_i32_0 : i32, i32
  }
  func.func @transform_6(%arg0: i32, %arg1: i32) -> (i32, i32) {
    %c0_i32 = arith.constant 0 : i32
    %c0_i32_0 = arith.constant 0 : i32
    %c0_i32_1 = arith.constant 0 : i32
    return %c0_i32, %c0_i32_0 : i32, i32
  }
  func.func @transform_7(%arg0: i32, %arg1: i32) -> (i32, i32, i32, i32) {
    %c0_i32 = arith.constant 0 : i32
    %c0_i32_0 = arith.constant 0 : i32
    %c0_i32_1 = arith.constant 0 : i32
    return %arg0, %arg1, %c0_i32, %c0_i32_0 : i32, i32, i32, i32
  }
}

</mosaic_0001>

<llo_original>
// kernel: tpu_custom_call.1
$region0: #{tpu_custom_call.1}
  #allocation0 [shape = 'u32[]', space=smem, size = 0x4, offset = 0x4, fixed_abs, tag = 'smem constant byte address 0x4 - core index']
  #allocation1 [shape = 'u32[72,128]{1,0:T(1,128)}', space=vmem, size = 0x9000, scoped, tag = 'internal scratch']
  %s0 = inlined_call_operand.hbm [shape: bf16[2,16,16,16], index: 0, kind: input, shape index: {}]
  %s1 = inlined_call_operand.vmem [shape: bf16[16,4], index: 1, kind: input, shape index: {}]
  %s2 = inlined_call_operand.vmem [shape: f32[1,4], index: 2, kind: input, shape index: {}]
  %s3 = inlined_call_operand.vmem [shape: bf16[36,4], index: 3, kind: input, shape index: {}]
  %s4 = inlined_call_operand.vmem [shape: f32[1,4], index: 4, kind: input, shape index: {}]
  %s5 = inlined_call_operand.vmem [shape: bf16[4,16], index: 5, kind: input, shape index: {}]
  %s6 = inlined_call_operand.vmem [shape: f32[1,16], index: 6, kind: input, shape index: {}]
  %s7 = inlined_call_operand.hbm [shape: bf16[2,16,16,16], index: 7, kind: output, shape index: {}]
  %s8 = sld [smem:[#allocation0]]
  $region65: #{tpu_custom_call.1} parent=0
    _
  %s10 = ssub.s32 1, %s8
  %s11 = scalar_select 0, %s10, %s8
  $region1: #{tpu_custom_call.1} parent=0
    #allocation2 [shape = 'u8[131072]{0}', space=vmem, size = 0x20000, scoped, tag = 'input window, operand 0']
    #allocation3 [shape = 's32[2]{0}', space=sflag, size = 0x8, scoped, tag = 'scoped memory for tpu_custom_call.1']
    #allocation4 [shape = 's32[2]{0}', space=sflag, size = 0x8, scoped, tag = 'scoped memory for tpu_custom_call.1']
    #allocation5 [shape = 'u8[65536]{0}', space=vmem, size = 0x10000, scoped, tag = 'output window, operand 0']
    %12 = vsyncpa [#allocation3], 0
    %s13 = scalar_lea.sflag [#allocation3], 1
    %14 = vsyncpa %s13, 0
    %15 = vsyncpa [#allocation4], 0
    %s16 = scalar_lea.sflag [#allocation4], 1
    %17 = vsyncpa %s16, 0
    loop: start=0, step=1, limit=6
    $region2: #{tpu_custom_call.1} parent=1 // loop_pre_header
      _
    $region3: #{tpu_custom_call.1} parent=1 // loop_header
      %s19 = sphi 0, %s23
      %p20 = scmp.ge.s32.totalorder %s19, 6
      %s26 = sphi 0, %s38
      %s27 = sphi 0, %s34
      %s28 = sphi 0, %s26
      %s29 = sphi 0, %s27
      %s30 = sphi 0, %s28
      %s31 = sphi 0, %s29
      %s41 = sphi 0, %s43
      %s44 = sphi 0, %s41
      %s45 = sphi 0, %s44
      %s61 = sphi 0, %s45
      %s65 = sphi 0, %s65
      %s67 = sphi 0, %s65
      %s68 = sphi 0, %s67
      %s82 = sphi 0, %s68
      %s86 = sphi 0, %s86
      %s88 = sphi 0, %s86
      %s89 = sphi 0, %s88
      %s103 = sphi 0, %s89
      %s107 = sphi 0, %s107
      %s109 = sphi 0, %s107
      %s110 = sphi 0, %s109
      %s124 = sphi 0, %s110
      %s128 = sphi 0, %s128
      %s130 = sphi 0, %s128
      %s131 = sphi 0, %s130
      %s145 = sphi 0, %s131
      %s149 = sphi 0, %s149
      %s151 = sphi 0, %s149
      %s152 = sphi 0, %s151
      %s166 = sphi 0, %s152
      %s170 = sphi 0, %s170
      %s172 = sphi 0, %s170
      %s173 = sphi 0, %s172
      %s187 = sphi 0, %s173
      %s195 = sphi 0, %s197
      %s198 = sphi 0, %s195
      %s199 = sphi 0, %s198
      %s215 = sphi 0, %s199
    $region4: #{tpu_custom_call.1} parent=1 // loop_header_branch
      %22 = sbr.rel (%p20) target = $region8
    $region5: #{tpu_custom_call.1} parent=1 // loop_body
      %s24 = ssub.s32 %s19, 1
      %s25 = ssub.s32 %s19, 2
      %s32 = sadd.s32 1, %s27
      %p33 = scmp.ge.s32.totalorder %s32, 2
      %s34 = scalar_select %p33, 0, %s32
      %s35 = sadd.s32 1, %s26
      %s36 = scalar_select %p33, %s35, %s26
      %p37 = scmp.ge.s32.totalorder %s36, 2
      %s38 = scalar_select %p37, 0, %s36
      %s39 = ssub.s32 %s26, %s38
      %p40 = scmp.eq.s32.totalorder %s39, 0
      %s42 = sadd.s32 %s41, 1
      %s43 = scalar_select %p40, %s41, %s42
      %p46 = pneg %p40
      %p47 = scmp.eq.s32.totalorder %s19, 3
      %p48 = por %p46, %p47
      %p49 = scmp.ne.s32.totalorder %s41, %s44
      %p50 = scmp.eq.s32.totalorder %s19, 0
      %p51 = por %p49, %p50
      %p52 = scmp.ne.s32.totalorder %s41, %s44
      %p53 = scmp.eq.s32.totalorder %s24, 3
      %p54 = por %p52, %p53
      %p55 = scmp.ne.s32.totalorder %s44, %s45
      %p56 = scmp.eq.s32.totalorder %s24, 0
      %p57 = por %p55, %p56
      %p58 = scmp.ne.s32.totalorder %s44, %s45
      %p59 = scmp.eq.s32.totalorder %s25, 3
      %p60 = por %p58, %p59
      %p62 = scmp.ne.s32.totalorder %s45, %s61
      %p63 = scmp.eq.s32.totalorder %s25, 0
      %p64 = por %p62, %p63
      %s66 = sadd.s32 %s65, 1
      %p69 = scmp.eq.s32.totalorder %s19, 3
      %p70 = scmp.ne.s32.totalorder %s65, %s67
      %p71 = scmp.eq.s32.totalorder %s19, 0
      %p72 = por %p70, %p71
      %p73 = scmp.ne.s32.totalorder %s65, %s67
      %p74 = scmp.eq.s32.totalorder %s24, 3
      %p75 = por %p73, %p74
      %p76 = scmp.ne.s32.totalorder %s67, %s68
      %p77 = scmp.eq.s32.totalorder %s24, 0
      %p78 = por %p76, %p77
      %p79 = scmp.ne.s32.totalorder %s67, %s68
      %p80 = scmp.eq.s32.totalorder %s25, 3
      %p81 = por %p79, %p80
      %p83 = scmp.ne.s32.totalorder %s68, %s82
      %p84 = scmp.eq.s32.totalorder %s25, 0
      %p85 = por %p83, %p84
      %s87 = sadd.s32 %s86, 1
      %p90 = scmp.eq.s32.totalorder %s19, 3
      %p91 = scmp.ne.s32.totalorder %s86, %s88
      %p92 = scmp.eq.s32.totalorder %s19, 0
      %p93 = por %p91, %p92
      %p94 = scmp.ne.s32.totalorder %s86, %s88
      %p95 = scmp.eq.s32.totalorder %s24, 3
      %p96 = por %p94, %p95
      %p97 = scmp.ne.s32.totalorder %s88, %s89
      %p98 = scmp.eq.s32.totalorder %s24, 0
      %p99 = por %p97, %p98
      %p100 = scmp.ne.s32.totalorder %s88, %s89
      %p101 = scmp.eq.s32.totalorder %s25, 3
      %p102 = por %p100, %p101
      %p104 = scmp.ne.s32.totalorder %s89, %s103
      %p105 = scmp.eq.s32.totalorder %s25, 0
      %p106 = por %p104, %p105
      %s108 = sadd.s32 %s107, 1
      %p111 = scmp.eq.s32.totalorder %s19, 3
      %p112 = scmp.ne.s32.totalorder %s107, %s109
      %p113 = scmp.eq.s32.totalorder %s19, 0
      %p114 = por %p112, %p113
      %p115 = scmp.ne.s32.totalorder %s107, %s109
      %p116 = scmp.eq.s32.totalorder %s24, 3
      %p117 = por %p115, %p116
      %p118 = scmp.ne.s32.totalorder %s109, %s110
      %p119 = scmp.eq.s32.totalorder %s24, 0
      %p120 = por %p118, %p119
      %p121 = scmp.ne.s32.totalorder %s109, %s110
      %p122 = scmp.eq.s32.totalorder %s25, 3
      %p123 = por %p121, %p122
      %p125 = scmp.ne.s32.totalorder %s110, %s124
      %p126 = scmp.eq.s32.totalorder %s25, 0
      %p127 = por %p125, %p126
      %s129 = sadd.s32 %s128, 1
      %p132 = scmp.eq.s32.totalorder %s19, 3
      %p133 = scmp.ne.s32.totalorder %s128, %s130
      %p134 = scmp.eq.s32.totalorder %s19, 0
      %p135 = por %p133, %p134
      %p136 = scmp.ne.s32.totalorder %s128, %s130
      %p137 = scmp.eq.s32.totalorder %s24, 3
      %p138 = por %p136, %p137
      %p139 = scmp.ne.s32.totalorder %s130, %s131
      %p140 = scmp.eq.s32.totalorder %s24, 0
      %p141 = por %p139, %p140
      %p142 = scmp.ne.s32.totalorder %s130, %s131
      %p143 = scmp.eq.s32.totalorder %s25, 3
      %p144 = por %p142, %p143
      %p146 = scmp.ne.s32.totalorder %s131, %s145
      %p147 = scmp.eq.s32.totalorder %s25, 0
      %p148 = por %p146, %p147
      %s150 = sadd.s32 %s149, 1
      %p153 = scmp.eq.s32.totalorder %s19, 3
      %p154 = scmp.ne.s32.totalorder %s149, %s151
      %p155 = scmp.eq.s32.totalorder %s19, 0
      %p156 = por %p154, %p155
      %p157 = scmp.ne.s32.totalorder %s149, %s151
      %p158 = scmp.eq.s32.totalorder %s24, 3
      %p159 = por %p157, %p158
      %p160 = scmp.ne.s32.totalorder %s151, %s152
      %p161 = scmp.eq.s32.totalorder %s24, 0
      %p162 = por %p160, %p161
      %p163 = scmp.ne.s32.totalorder %s151, %s152
      %p164 = scmp.eq.s32.totalorder %s25, 3
      %p165 = por %p163, %p164
      %p167 = scmp.ne.s32.totalorder %s152, %s166
      %p168 = scmp.eq.s32.totalorder %s25, 0
      %p169 = por %p167, %p168
      %s171 = sadd.s32 %s170, 1
      %p174 = scmp.eq.s32.totalorder %s19, 3
      %p175 = scmp.ne.s32.totalorder %s170, %s172
      %p176 = scmp.eq.s32.totalorder %s19, 0
      %p177 = por %p175, %p176
      %p178 = scmp.ne.s32.totalorder %s170, %s172
      %p179 = scmp.eq.s32.totalorder %s24, 3
      %p180 = por %p178, %p179
      %p181 = scmp.ne.s32.totalorder %s172, %s173
      %p182 = scmp.eq.s32.totalorder %s24, 0
      %p183 = por %p181, %p182
      %p184 = scmp.ne.s32.totalorder %s172, %s173
      %p185 = scmp.eq.s32.totalorder %s25, 3
      %p186 = por %p184, %p185
      %p188 = scmp.ne.s32.totalorder %s173, %s187
      %p189 = scmp.eq.s32.totalorder %s25, 0
      %p190 = por %p188, %p189
      %s191 = ssub.s32 %s26, %s38
      %s192 = ssub.s32 %s27, %s34
      %s193 = sor.u32 %s191, %s192
      %p194 = scmp.eq.s32.totalorder %s193, 0
      %s196 = sadd.s32 %s195, 1
      %s197 = scalar_select %p194, %s195, %s196
      %p200 = pneg %p194
      %p201 = scmp.eq.s32.totalorder %s19, 3
      %p202 = por %p200, %p201
      %p203 = scmp.ne.s32.totalorder %s195, %s198
      %p204 = scmp.eq.s32.totalorder %s19, 0
      %p205 = por %p203, %p204
      %p206 = scmp.ne.s32.totalorder %s195, %s198
      %p207 = scmp.eq.s32.totalorder %s24, 3
      %p208 = por %p206, %p207
      %p209 = scmp.ne.s32.totalorder %s198, %s199
      %p210 = scmp.eq.s32.totalorder %s24, 0
      %p211 = por %p209, %p210
      %p212 = scmp.ne.s32.totalorder %s198, %s199
      %p213 = scmp.eq.s32.totalorder %s25, 3
      %p214 = por %p212, %p213
      %p216 = scmp.ne.s32.totalorder %s199, %s215
      %p217 = scmp.eq.s32.totalorder %s25, 0
      %p218 = por %p216, %p217
      %p219 = scmp.le.s32.totalorder 1, %s19
      %p220 = scmp.lt.s32.totalorder %s19, 5
      %p221 = pnand %p219, %p220
      %p222 = pneg %p221
      // Predicated region
      $region9: #{tpu_custom_call.1} parent=5 // pred_check
        _
      $region10: #{tpu_custom_call.1} parent=5 // pred_check_branch
        %224 = sbr.rel (%p221) target = $region12
      $region11: #{tpu_custom_call.1} parent=5 // pred_region
        %s225 = ssub.s32 %s19, 1
        // Predicated region
        $region13: #{tpu_custom_call.1} parent=11 // pred_check
          %p226 = pneg %p78
        $region14: #{tpu_custom_call.1} parent=11 // pred_check_branch
          %228 = sbr.rel (%p226) target = $region16
        $region15: #{tpu_custom_call.1} parent=11 // pred_region
          _
        $region16: #{tpu_custom_call.1} parent=11 // pred_fallthru
          _
        // Predicated region
        $region17: #{tpu_custom_call.1} parent=11 // pred_check
          %p229 = pneg %p99
        $region18: #{tpu_custom_call.1} parent=11 // pred_check_branch
          %231 = sbr.rel (%p229) target = $region20
        $region19: #{tpu_custom_call.1} parent=11 // pred_region
          _
        $region20: #{tpu_custom_call.1} parent=11 // pred_fallthru
          _
        // Predicated region
        $region21: #{tpu_custom_call.1} parent=11 // pred_check
          %p232 = pneg %p120
        $region22: #{tpu_custom_call.1} parent=11 // pred_check_branch
          %234 = sbr.rel (%p232) target = $region24
        $region23: #{tpu_custom_call.1} parent=11 // pred_region
          _
        $region24: #{tpu_custom_call.1} parent=11 // pred_fallthru
          _
        // Predicated region
        $region25: #{tpu_custom_call.1} parent=11 // pred_check
          %p235 = pneg %p141
        $region26: #{tpu_custom_call.1} parent=11 // pred_check_branch
          %237 = sbr.rel (%p235) target = $region28
        $region27: #{tpu_custom_call.1} parent=11 // pred_region
          _
        $region28: #{tpu_custom_call.1} parent=11 // pred_fallthru
          _
        // Predicated region
        $region29: #{tpu_custom_call.1} parent=11 // pred_check
          %p238 = pneg %p162
        $region30: #{tpu_custom_call.1} parent=11 // pred_check_branch
          %240 = sbr.rel (%p238) target = $region32
        $region31: #{tpu_custom_call.1} parent=11 // pred_region
          _
        $region32: #{tpu_custom_call.1} parent=11 // pred_fallthru
          _
        // Predicated region
        $region33: #{tpu_custom_call.1} parent=11 // pred_check
          %p241 = pneg %p183
        $region34: #{tpu_custom_call.1} parent=11 // pred_check_branch
          %243 = sbr.rel (%p241) target = $region36
        $region35: #{tpu_custom_call.1} parent=11 // pred_region
          _
        $region36: #{tpu_custom_call.1} parent=11 // pred_fallthru
          _
      $region12: #{tpu_custom_call.1} parent=5 // pred_fallthru
        _
      %p244 = scmp.lt.s32.totalorder %s19, 4
      // Predicated region
      $region37: #{tpu_custom_call.1} parent=5 // pred_check
        %p245 = pneg %p244
      $region38: #{tpu_custom_call.1} parent=5 // pred_check_branch
        %247 = sbr.rel (%p245) target = $region40
      $region39: #{tpu_custom_call.1} parent=5 // pred_region
        // Predicated region
        $region41: #{tpu_custom_call.1} parent=39 // pred_check
          %p248 = pneg %p51
        $region42: #{tpu_custom_call.1} parent=39 // pred_check_branch
          %250 = sbr.rel (%p248) target = $region44
        $region43: #{tpu_custom_call.1} parent=39 // pred_region
          %s251 = sand.u32 %s41, 1
          %s252 = scalar_lea.sflag [#allocation3], %s251
          %s253 = sand.u32 %s41, 1
          %s254 = smul.addr %s253, 128
          %s255 = scalar_lea.vmem [#allocation2], %s254
          %257 = vsyncadd %s252, 0
          %s258 = smul.addr %s26, 32
          %s259 = smul.addr %s258, 4
          %s260 = scalar_lea.hbm %s0, %s259
          %s261 = sshll.u32 %s260, 4
          %s262 = int_to_ptr.hbm [resolvable:$true] %s261
          %s263 = sshll.u32 %s255, 4
          %s264 = int_to_ptr.vmem [resolvable:$true] %s263
          %269 = dma.hbm_to_vmem [thread:$0]  %s262, 2048, %s264, %s252, 64, 64, 4
        $region44: #{tpu_custom_call.1} parent=39 // pred_fallthru
          _
      $region40: #{tpu_custom_call.1} parent=5 // pred_fallthru
        _
      %p270 = scmp.le.s32.totalorder 1, %s19
      %p271 = scmp.lt.s32.totalorder %s19, 5
      %p272 = pnand %p270, %p271
      %p273 = pneg %p272
      // Predicated region
      $region45: #{tpu_custom_call.1} parent=5 // pred_check
        _
      $region46: #{tpu_custom_call.1} parent=5 // pred_check_branch
        %275 = sbr.rel (%p272) target = $region48
      $region47: #{tpu_custom_call.1} parent=5 // pred_region
        %s276 = ssub.s32 %s19, 1
        %s277 = sand.u32 %s44, 1
        %s278 = scalar_lea.sflag [#allocation3], %s277
        %s279 = sand.u32 %s44, 1
        %s280 = smul.addr %s279, 128
        %s281 = scalar_lea.vmem [#allocation2], %s280
        // Predicated region
        $region49: #{tpu_custom_call.1} parent=47 // pred_check
          %p282 = pneg %p57
        $region50: #{tpu_custom_call.1} parent=47 // pred_check_branch
          %284 = sbr.rel (%p282) target = $region52
        $region51: #{tpu_custom_call.1} parent=47 // pred_region
          %286 = dma.done %s278, 2048
        $region52: #{tpu_custom_call.1} parent=47 // pred_fallthru
          _
        %s287 = sand.u32 %s44, 1
        %s288 = scalar_lea.sflag [#allocation3], %s287
        %s289 = sand.u32 %s44, 1
        %s290 = smul.addr %s289, 128
        %s291 = scalar_lea.vmem [#allocation2], %s290
        %p292 = pneg %p57
        %p293 = pneg %p54
        %p294 = pneg %p78
        %p295 = pneg %p75
        %p296 = pneg %p99
        %p297 = pneg %p96
        %p298 = pneg %p120
        %p299 = pneg %p117
        %p300 = pneg %p141
        %p301 = pneg %p138
        %p302 = pneg %p162
        %p303 = pneg %p159
        %p304 = pneg %p183
        %p305 = pneg %p180
        %p306 = pneg %p211
        %p307 = pneg %p208
        %s308 = sand.u32 %s198, 1
        %s309 = scalar_lea.sflag [#allocation4], %s308
        %s310 = sand.u32 %s198, 1
        %s311 = smul.addr %s310, 64
        %s312 = scalar_lea.vmem [#allocation5], %s311
        %s313 = smul.u32 8, %s29
        %s315 = smul.u32 %s29, 8
        %s316 = smul.u32 %s315, 2
        %s317 = smul.addr %s316, 4
        %s318 = scalar_lea.vmem %s281, %s317 [#allocation2]
        %v319 = vld [vmem:[%s318] sm:$0xf]
        %v320 = vld [vmem:[%s318 + $0x4] sm:$0xf]
        %v321 = vld [vmem:[%s318 + $0x8] sm:$0xf]
        %v322 = vld [vmem:[%s318 + $0xc] sm:$0xf]
        %v323 = vld [vmem:[%s318 + $0x10] sm:$0xf]
        %v324 = vld [vmem:[%s318 + $0x14] sm:$0xf]
        %v325 = vld [vmem:[%s318 + $0x18] sm:$0xf]
        %v326 = vld [vmem:[%s318 + $0x1c] sm:$0xf]
        %v327 = vld [vmem:[%s318 + $0x20] sm:$0xf]
        %v328 = vld [vmem:[%s318 + $0x24] sm:$0xf]
        %v329 = vld [vmem:[%s318 + $0x28] sm:$0xf]
        %v330 = vld [vmem:[%s318 + $0x2c] sm:$0xf]
        %v331 = vld [vmem:[%s318 + $0x30] sm:$0xf]
        %v332 = vld [vmem:[%s318 + $0x34] sm:$0xf]
        %v333 = vld [vmem:[%s318 + $0x38] sm:$0xf]
        %v334 = vld [vmem:[%s318 + $0x3c] sm:$0xf]
        %s335 = ssub.s32 %s315, 1
        %p336 = scmp.gt.s32.totalorder %s335, 0
        %s337 = scalar_select %p336, %s335, 0
        %s338 = sadd.s32 %s315, 8
        %p339 = scmp.lt.s32.totalorder %s338, 15
        %s340 = scalar_select %p339, %s338, 15
        %s341 = smul.u32 %s337, 2
        %s342 = smul.addr %s341, 4
        %s343 = scalar_lea.vmem %s281, %s342 [#allocation2]
        %v344 = vld [vmem:[%s343] sm:$0xf]
        %v345 = vld [vmem:[%s343 + $0x4] sm:$0xf]
        %s346 = smul.u32 %s340, 2
        %s347 = smul.addr %s346, 4
        %s348 = scalar_lea.vmem %s281, %s347 [#allocation2]
        %v349 = vld [vmem:[%s348] sm:$0xf]
        %v350 = vld [vmem:[%s348 + $0x4] sm:$0xf]
        %v351 = vld [vmem:[%s1] sm:$0xf]
        %v352 = vld [vmem:[%s1 + $0x4] sm:$0xf]
        %v353 = vld [vmem:[%s2] sm:$0x1]
        %v355 = vperm.slane %v353, 0
        %v377 = vunpack.c.l.b16 %v344
        %v378 = vunpack.c.l.b16 %v345
        %v379 = vunpack.c.l.b16 %v319
        %v380 = vunpack.c.l.b16 %v320
        %v381 = vunpack.c.l.b16 %v321
        %v382 = vunpack.c.l.b16 %v322
        %v383 = vunpack.c.l.b16 %v323
        %v384 = vunpack.c.l.b16 %v324
        %v385 = vunpack.c.l.b16 %v325
        %v386 = vunpack.c.l.b16 %v326
        %v387 = vunpack.c.l.b16 %v327
        %v388 = vunpack.c.l.b16 %v328
        %v389 = vunpack.c.l.b16 %v329
        %v390 = vunpack.c.l.b16 %v330
        %v391 = vunpack.c.l.b16 %v331
        %v392 = vunpack.c.l.b16 %v332
        %v393 = vunpack.c.l.b16 %v333
        %v394 = vunpack.c.l.b16 %v334
        %v395 = vunpack.c.l.b16 %v349
        %v396 = vunpack.c.l.b16 %v350
        %v397 = vpack.c.b16 %v378, %v377
        %v398 = vpack.c.b16 %v380, %v379
        %v399 = vpack.c.b16 %v382, %v381
        %v400 = vpack.c.b16 %v384, %v383
        %v401 = vpack.c.b16 %v386, %v385
        %v402 = vpack.c.b16 %v388, %v387
        %v403 = vpack.c.b16 %v390, %v389
        %v404 = vpack.c.b16 %v392, %v391
        %v405 = vpack.c.b16 %v394, %v393
        %v406 = vpack.c.b16 %v396, %v395
        %v409 = vunpack.c.l.b16 %v351
        %v410 = vunpack.c.l.b16 %v352
        %v411 = vpack.c.b16 %v410, %v409
        %vm413 = vcmask 130048
        %v415 = vsel %vm413, %v397, 0
        %v418 = vsel %vm413, %v398, 0
        %v421 = vsel %vm413, %v399, 0
        %v424 = vsel %vm413, %v400, 0
        %v427 = vsel %vm413, %v401, 0
        %v430 = vsel %vm413, %v402, 0
        %v433 = vsel %vm413, %v403, 0
        %v436 = vsel %vm413, %v404, 0
        %v439 = vsel %vm413, %v405, 0
        %v442 = vsel %vm413, %v406, 0
        %444 = vmatpush.bf16.msra.mxu0 0
        %445 = vmatpush.bf16.msra.mxu0 0
        %446 = vmatpush.bf16.msra.mxu0 0
        %447 = vmatpush.bf16.msra.mxu0 0
        %448 = vmatpush.bf16.msra.mxu0 0
        %449 = vmatpush.bf16.msra.mxu0 0
        %450 = vmatpush.bf16.msra.mxu0 0
        %451 = vmatpush.bf16.msra.mxu0 %v411
        %452 = vmatmul.bf16.gmra.mxu0 %v415
        %v453 = vpop.f32.mrf.mxu0
        %v454 = vadd.f32 %v355, %v453
        %v455 = vpop.f32.mrf.mxu0
        %v456 = vadd.f32 %v355, %v455
        %457 = vmatmul.bf16.gmra.mxu0 %v418
        %v458 = vpop.f32.mrf.mxu0
        %v459 = vadd.f32 %v355, %v458
        %v460 = vpop.f32.mrf.mxu0
        %v461 = vadd.f32 %v355, %v460
        %462 = vmatmul.bf16.gmra.mxu0 %v421
        %v463 = vpop.f32.mrf.mxu0
        %v464 = vadd.f32 %v355, %v463
        %v465 = vpop.f32.mrf.mxu0
        %v466 = vadd.f32 %v355, %v465
        %467 = vmatmul.bf16.gmra.mxu0 %v424
        %v468 = vpop.f32.mrf.mxu0
        %v469 = vadd.f32 %v355, %v468
        %v470 = vpop.f32.mrf.mxu0
        %v471 = vadd.f32 %v355, %v470
        %472 = vmatmul.bf16.gmra.mxu0 %v427
        %v473 = vpop.f32.mrf.mxu0
        %v474 = vadd.f32 %v355, %v473
        %v475 = vpop.f32.mrf.mxu0
        %v476 = vadd.f32 %v355, %v475
        %477 = vmatmul.bf16.gmra.mxu0 %v430
        %v478 = vpop.f32.mrf.mxu0
        %v479 = vadd.f32 %v355, %v478
        %v480 = vpop.f32.mrf.mxu0
        %v481 = vadd.f32 %v355, %v480
        %482 = vmatmul.bf16.gmra.mxu0 %v433
        %v483 = vpop.f32.mrf.mxu0
        %v484 = vadd.f32 %v355, %v483
        %v485 = vpop.f32.mrf.mxu0
        %v486 = vadd.f32 %v355, %v485
        %487 = vmatmul.bf16.gmra.mxu0 %v436
        %v488 = vpop.f32.mrf.mxu0
        %v489 = vadd.f32 %v355, %v488
        %v490 = vpop.f32.mrf.mxu0
        %v491 = vadd.f32 %v355, %v490
        %492 = vmatmul.bf16.gmra.mxu0 %v439
        %v493 = vpop.f32.mrf.mxu0
        %v494 = vadd.f32 %v355, %v493
        %v495 = vpop.f32.mrf.mxu0
        %v496 = vadd.f32 %v355, %v495
        %497 = vmatmul.bf16.gmra.mxu0 %v442
        %v498 = vpop.f32.mrf.mxu0
        %v499 = vadd.f32 %v355, %v498
        %v500 = vpop.f32.mrf.mxu0
        %v501 = vadd.f32 %v355, %v500
        %502 = vdwg.mxu0
        %v503 = vmax.f32 %v454, 0.0
        %v504 = vmax.f32 %v456, 0.0
        %v505 = vmax.f32 %v459, 0.0
        %v506 = vmax.f32 %v461, 0.0
        %v507 = vmax.f32 %v464, 0.0
        %v508 = vmax.f32 %v466, 0.0
        %v509 = vmax.f32 %v469, 0.0
        %v510 = vmax.f32 %v471, 0.0
        %v511 = vmax.f32 %v474, 0.0
        %v512 = vmax.f32 %v476, 0.0
        %v513 = vmax.f32 %v479, 0.0
        %v514 = vmax.f32 %v481, 0.0
        %v515 = vmax.f32 %v484, 0.0
        %v516 = vmax.f32 %v486, 0.0
        %v517 = vmax.f32 %v489, 0.0
        %v518 = vmax.f32 %v491, 0.0
        %v519 = vmax.f32 %v494, 0.0
        %v520 = vmax.f32 %v496, 0.0
        %v521 = vmax.f32 %v499, 0.0
        %v522 = vmax.f32 %v501, 0.0
        %p523 = scmp.gt.s32.totalorder %s29, 0
        %s524 = scalar_select %p523, 1, 0
        %v525 = vstv %s524
        %vm526 = vcmp.eq.s32.totalorder %v525, 1
        %s527 = sadd.s32 %s29, 1
        %p528 = scmp.lt.s32.totalorder %s527, 2
        %s529 = scalar_select %p528, 1, 0
        %v530 = vstv %s529
        %vm531 = vcmp.eq.s32.totalorder %v530, 1
        %v532 = vsel %vm526, 1, 0
        %v533 = vsel %vm531, 1, 0
        %vm534 = vcmp.eq.s32.totalorder %v532, 1
        %vm535 = vcmp.eq.s32.totalorder %v533, 1
        %v536 = vsel %vm534, %v503, 0.0
        %v537 = vsel %vm534, %v504, 0.0
        %v538 = vsel 1, %v505, 0.0
        %v539 = vsel 1, %v506, 0.0
        %v540 = vsel 1, %v507, 0.0
        %v541 = vsel 1, %v508, 0.0
        %v542 = vsel 1, %v509, 0.0
        %v543 = vsel 1, %v510, 0.0
        %v544 = vsel 1, %v511, 0.0
        %v545 = vsel 1, %v512, 0.0
        %v546 = vsel 1, %v513, 0.0
        %v547 = vsel 1, %v514, 0.0
        %v548 = vsel 1, %v515, 0.0
        %v549 = vsel 1, %v516, 0.0
        %v550 = vsel 1, %v517, 0.0
        %v551 = vsel 1, %v518, 0.0
        %v552 = vsel 1, %v519, 0.0
        %v553 = vsel 1, %v520, 0.0
        %v554 = vsel %vm535, %v521, 0.0
        %v555 = vsel %vm535, %v522, 0.0
        %v556 = vpack.c.bf16 %v536, %v536
        %v557 = vpack.c.bf16 %v537, %v537
        %v558 = vpack.c.bf16 %v538, %v538
        %v559 = vpack.c.bf16 %v539, %v539
        %v560 = vpack.c.bf16 %v540, %v540
        %v561 = vpack.c.bf16 %v541, %v541
        %v562 = vpack.c.bf16 %v542, %v542
        %v563 = vpack.c.bf16 %v543, %v543
        %v564 = vpack.c.bf16 %v544, %v544
        %v565 = vpack.c.bf16 %v545, %v545
        %v566 = vpack.c.bf16 %v546, %v546
        %v567 = vpack.c.bf16 %v547, %v547
        %v568 = vpack.c.bf16 %v548, %v548
        %v569 = vpack.c.bf16 %v549, %v549
        %v570 = vpack.c.bf16 %v550, %v550
        %v571 = vpack.c.bf16 %v551, %v551
        %v572 = vpack.c.bf16 %v552, %v552
        %v573 = vpack.c.bf16 %v553, %v553
        %v574 = vpack.c.bf16 %v554, %v554
        %v575 = vpack.c.bf16 %v555, %v555
        %v596 = vunpack.c.l.b16 %v556
        %v597 = vunpack.c.l.b16 %v557
        %v598 = vunpack.c.l.b16 %v558
        %v599 = vunpack.c.l.b16 %v559
        %v600 = vunpack.c.l.b16 %v560
        %v601 = vunpack.c.l.b16 %v561
        %v602 = vunpack.c.l.b16 %v562
        %v603 = vunpack.c.l.b16 %v563
        %v604 = vunpack.c.l.b16 %v564
        %v605 = vunpack.c.l.b16 %v565
        %v606 = vunpack.c.l.b16 %v566
        %v607 = vunpack.c.l.b16 %v567
        %v608 = vunpack.c.l.b16 %v568
        %v609 = vunpack.c.l.b16 %v569
        %v610 = vunpack.c.l.b16 %v570
        %v611 = vunpack.c.l.b16 %v571
        %v612 = vunpack.c.l.b16 %v572
        %v613 = vunpack.c.l.b16 %v573
        %v614 = vunpack.c.l.b16 %v574
        %v615 = vunpack.c.l.b16 %v575
        %v616 = vpack.c.b16 %v597, %v596
        %v617 = vpack.c.b16 %v599, %v598
        %v618 = vpack.c.b16 %v601, %v600
        %v619 = vpack.c.b16 %v603, %v602
        %v620 = vpack.c.b16 %v605, %v604
        %v621 = vpack.c.b16 %v607, %v606
        %v622 = vpack.c.b16 %v609, %v608
        %v623 = vpack.c.b16 %v611, %v610
        %v624 = vpack.c.b16 %v613, %v612
        %v625 = vpack.c.b16 %v615, %v614
        %v627 = vshrl.u32 %v616, 16
        %v629 = vrot.slane %v627, 7
        %v630 = vshll.u32 %v616, 16
        %v632 = vor.u32 %v629, %v630
        %v634 = vshrl.u32 %v617, 16
        %v636 = vrot.slane %v634, 7
        %v637 = vshll.u32 %v617, 16
        %v639 = vor.u32 %v636, %v637
        %v641 = vshrl.u32 %v618, 16
        %v643 = vrot.slane %v641, 7
        %v644 = vshll.u32 %v618, 16
        %v646 = vor.u32 %v643, %v644
        %v648 = vshrl.u32 %v619, 16
        %v650 = vrot.slane %v648, 7
        %v651 = vshll.u32 %v619, 16
        %v653 = vor.u32 %v650, %v651
        %v655 = vshrl.u32 %v620, 16
        %v657 = vrot.slane %v655, 7
        %v658 = vshll.u32 %v620, 16
        %v660 = vor.u32 %v657, %v658
        %v662 = vshrl.u32 %v621, 16
        %v664 = vrot.slane %v662, 7
        %v665 = vshll.u32 %v621, 16
        %v667 = vor.u32 %v664, %v665
        %v669 = vshrl.u32 %v622, 16
        %v671 = vrot.slane %v669, 7
        %v672 = vshll.u32 %v622, 16
        %v674 = vor.u32 %v671, %v672
        %v676 = vshrl.u32 %v623, 16
        %v678 = vrot.slane %v676, 7
        %v679 = vshll.u32 %v623, 16
        %v681 = vor.u32 %v678, %v679
        %v683 = vshrl.u32 %v624, 16
        %v685 = vrot.slane %v683, 7
        %v686 = vshll.u32 %v624, 16
        %v688 = vor.u32 %v685, %v686
        %v690 = vshrl.u32 %v625, 16
        %v692 = vrot.slane %v690, 7
        %v693 = vshll.u32 %v625, 16
        %v695 = vor.u32 %v692, %v693
        %vm716 = vcmask 1040384
        %vm717 = vsmask.f32 256
        %vm718 = vmand %vm716, %vm717
        %v719 = vsel %vm718, 0, %v632
        %v720 = vsel %vm718, 0, %v639
        %v721 = vsel %vm718, 0, %v646
        %v722 = vsel %vm718, 0, %v653
        %v723 = vsel %vm718, 0, %v660
        %v724 = vsel %vm718, 0, %v667
        %v725 = vsel %vm718, 0, %v674
        %v726 = vsel %vm718, 0, %v681
        %v727 = vsel %vm718, 0, %v688
        %v728 = vsel %vm718, 0, %v695
        %v729 = vsel %vm718, %v629, 0
        %v730 = vsel %vm718, %v636, 0
        %v731 = vsel %vm718, %v643, 0
        %v732 = vsel %vm718, %v650, 0
        %v733 = vsel %vm718, %v657, 0
        %v734 = vsel %vm718, %v664, 0
        %v735 = vsel %vm718, %v671, 0
        %v736 = vsel %vm718, %v678, 0
        %v737 = vsel %vm718, %v685, 0
        %v738 = vsel %vm718, %v692, 0
        %vm739 = vsmask.f32 7424
        %v741 = vshrl.u32 %v719, 16
        %v743 = vshll.u32 %v719, 16
        %v745 = vrot.slane %v743, 1
        %v746 = vor.u32 %v741, %v745
        %v748 = vshll.u32 %v729, 16
        %v750 = vrot.slane %v748, 1
        %v751 = vsel %vm739, %v746, %v750
        %v753 = vshrl.u32 %v720, 16
        %v755 = vshll.u32 %v720, 16
        %v757 = vrot.slane %v755, 1
        %v758 = vor.u32 %v753, %v757
        %v760 = vshll.u32 %v730, 16
        %v762 = vrot.slane %v760, 1
        %v763 = vsel %vm739, %v758, %v762
        %v765 = vshrl.u32 %v721, 16
        %v767 = vshll.u32 %v721, 16
        %v769 = vrot.slane %v767, 1
        %v770 = vor.u32 %v765, %v769
        %v772 = vshll.u32 %v731, 16
        %v774 = vrot.slane %v772, 1
        %v775 = vsel %vm739, %v770, %v774
        %v777 = vshrl.u32 %v722, 16
        %v779 = vshll.u32 %v722, 16
        %v781 = vrot.slane %v779, 1
        %v782 = vor.u32 %v777, %v781
        %v784 = vshll.u32 %v732, 16
        %v786 = vrot.slane %v784, 1
        %v787 = vsel %vm739, %v782, %v786
        %v789 = vshrl.u32 %v723, 16
        %v791 = vshll.u32 %v723, 16
        %v793 = vrot.slane %v791, 1
        %v794 = vor.u32 %v789, %v793
        %v796 = vshll.u32 %v733, 16
        %v798 = vrot.slane %v796, 1
        %v799 = vsel %vm739, %v794, %v798
        %v801 = vshrl.u32 %v724, 16
        %v803 = vshll.u32 %v724, 16
        %v805 = vrot.slane %v803, 1
        %v806 = vor.u32 %v801, %v805
        %v808 = vshll.u32 %v734, 16
        %v810 = vrot.slane %v808, 1
        %v811 = vsel %vm739, %v806, %v810
        %v813 = vshrl.u32 %v725, 16
        %v815 = vshll.u32 %v725, 16
        %v817 = vrot.slane %v815, 1
        %v818 = vor.u32 %v813, %v817
        %v820 = vshll.u32 %v735, 16
        %v822 = vrot.slane %v820, 1
        %v823 = vsel %vm739, %v818, %v822
        %v825 = vshrl.u32 %v726, 16
        %v827 = vshll.u32 %v726, 16
        %v829 = vrot.slane %v827, 1
        %v830 = vor.u32 %v825, %v829
        %v832 = vshll.u32 %v736, 16
        %v834 = vrot.slane %v832, 1
        %v835 = vsel %vm739, %v830, %v834
        %836 = vrot.lane.b32.xlu0 %v751, 4
        %v837 = vpop.permute.xlu0 %836
        %838 = vrot.lane.b32.xlu0 %v763, 4
        %v839 = vpop.permute.xlu0 %838
        %840 = vrot.lane.b32.xlu0 %v775, 4
        %v841 = vpop.permute.xlu0 %840
        %842 = vrot.lane.b32.xlu0 %v787, 4
        %v843 = vpop.permute.xlu0 %842
        %844 = vrot.lane.b32.xlu0 %v799, 4
        %v845 = vpop.permute.xlu0 %844
        %846 = vrot.lane.b32.xlu0 %v811, 4
        %v847 = vpop.permute.xlu0 %846
        %848 = vrot.lane.b32.xlu0 %v823, 4
        %v849 = vpop.permute.xlu0 %848
        %850 = vrot.lane.b32.xlu0 %v835, 4
        %v851 = vpop.permute.xlu0 %850
        %vm868 = vcmask 1046528
        %v869 = vrot.slane %v719, 1
        %v870 = vrot.slane %v729, 1
        %v871 = vsel %vm868, %v869, %v870
        %v872 = vrot.slane %v720, 1
        %v873 = vrot.slane %v730, 1
        %v874 = vsel %vm868, %v872, %v873
        %v875 = vrot.slane %v721, 1
        %v876 = vrot.slane %v731, 1
        %v877 = vsel %vm868, %v875, %v876
        %v878 = vrot.slane %v722, 1
        %v879 = vrot.slane %v732, 1
        %v880 = vsel %vm868, %v878, %v879
        %v881 = vrot.slane %v723, 1
        %v882 = vrot.slane %v733, 1
        %v883 = vsel %vm868, %v881, %v882
        %v884 = vrot.slane %v724, 1
        %v885 = vrot.slane %v734, 1
        %v886 = vsel %vm868, %v884, %v885
        %v887 = vrot.slane %v725, 1
        %v888 = vrot.slane %v735, 1
        %v889 = vsel %vm868, %v887, %v888
        %v890 = vrot.slane %v726, 1
        %v891 = vrot.slane %v736, 1
        %v892 = vsel %vm868, %v890, %v891
        %893 = vrot.lane.b32.xlu0 %v871, 8
        %v894 = vpop.permute.xlu0 %893
        %895 = vrot.lane.b32.xlu0 %v874, 8
        %v896 = vpop.permute.xlu0 %895
        %897 = vrot.lane.b32.xlu0 %v877, 8
        %v898 = vpop.permute.xlu0 %897
        %899 = vrot.lane.b32.xlu0 %v880, 8
        %v900 = vpop.permute.xlu0 %899
        %901 = vrot.lane.b32.xlu0 %v883, 8
        %v902 = vpop.permute.xlu0 %901
        %903 = vrot.lane.b32.xlu0 %v886, 8
        %v904 = vpop.permute.xlu0 %903
        %905 = vrot.lane.b32.xlu0 %v889, 8
        %v906 = vpop.permute.xlu0 %905
        %907 = vrot.lane.b32.xlu0 %v892, 8
        %v908 = vpop.permute.xlu0 %907
        %vm909 = vcmask 31744
        %v911 = vsel %vm909, %v719, %v837
        %v913 = vsel %vm909, %v720, %v839
        %v915 = vsel %vm909, %v721, %v841
        %v917 = vsel %vm909, %v722, %v843
        %v919 = vsel %vm909, %v723, %v845
        %v921 = vsel %vm909, %v724, %v847
        %v923 = vsel %vm909, %v725, %v849
        %v925 = vsel %vm909, %v726, %v851
        %vm926 = vcmask 64512
        %v928 = vsel %vm926, %v911, %v894
        %v930 = vsel %vm926, %v913, %v896
        %v932 = vsel %vm926, %v915, %v898
        %v934 = vsel %vm926, %v917, %v900
        %v936 = vsel %vm926, %v919, %v902
        %v938 = vsel %vm926, %v921, %v904
        %v940 = vsel %vm926, %v923, %v906
        %v942 = vsel %vm926, %v925, %v908
        %v943 = vld [vmem:[%s3] sm:$0xf]
        %v944 = vld [vmem:[%s3 + $0x4] sm:$0x3]
        %v946 = vshrl.u32 %v727, 16
        %v948 = vshll.u32 %v727, 16
        %v950 = vrot.slane %v948, 1
        %v951 = vor.u32 %v946, %v950
        %v953 = vshll.u32 %v737, 16
        %v955 = vrot.slane %v953, 1
        %v956 = vsel %vm739, %v951, %v955
        %957 = vrot.lane.b32.xlu0 %v956, 4
        %v958 = vpop.permute.xlu0 %957
        %v961 = vrot.slane %v727, 1
        %v962 = vrot.slane %v737, 1
        %v963 = vsel %vm868, %v961, %v962
        %964 = vrot.lane.b32.xlu0 %v963, 8
        %v965 = vpop.permute.xlu0 %964
        %v967 = vsel %vm909, %v727, %v958
        %v969 = vsel %vm926, %v967, %v965
        %v970 = vld [vmem:[%s3 + $0x4] sm:$0xc]
        %v971 = vld [vmem:[%s3 + $0x8] sm:$0xf]
        %v974 = vunpack.c.l.b16 %v970
        %v975 = vunpack.c.l.b16 %v971
        %v976 = vpack.c.b16 %v975, %v974
        %v977 = vrot.slane %v976, 2
        %vm978 = vcmask 97280
        %v979 = vsel %vm978, %v930, 0
        %v981 = vsel %vm978, %v932, 0
        %v983 = vsel %vm978, %v934, 0
        %v985 = vsel %vm978, %v936, 0
        %v987 = vsel %vm978, %v938, 0
        %v989 = vsel %vm978, %v940, 0
        %v991 = vsel %vm978, %v942, 0
        %v993 = vsel %vm978, %v969, 0
        %vm995 = vcmask 1045504
        %v997 = vsel %vm995, %v977, 0
        %999 = vmatpush.bf16.msra.mxu0 0
        %1000 = vmatpush.bf16.msra.mxu0 0
        %1001 = vmatpush.bf16.msra.mxu0 0
        %1002 = vmatpush.bf16.msra.mxu0 0
        %1003 = vmatpush.bf16.msra.mxu0 0
        %1004 = vmatpush.bf16.msra.mxu0 0
        %1005 = vmatpush.bf16.msra.mxu0 0
        %1006 = vmatpush.bf16.msra.mxu0 %v997
        %1007 = vmatmul.bf16.gmra.mxu0 %v979
        %v1008 = vpop.f32.mrf.mxu0
        %v1009 = vadd.f32 0.0, %v1008
        %v1010 = vpop.f32.mrf.mxu0
        %v1011 = vadd.f32 0.0, %v1010
        %1012 = vmatmul.bf16.gmra.mxu0 %v981
        %v1013 = vpop.f32.mrf.mxu0
        %v1014 = vadd.f32 0.0, %v1013
        %v1015 = vpop.f32.mrf.mxu0
        %v1016 = vadd.f32 0.0, %v1015
        %1017 = vmatmul.bf16.gmra.mxu0 %v983
        %v1018 = vpop.f32.mrf.mxu0
        %v1019 = vadd.f32 0.0, %v1018
        %v1020 = vpop.f32.mrf.mxu0
        %v1021 = vadd.f32 0.0, %v1020
        %1022 = vmatmul.bf16.gmra.mxu0 %v985
        %v1023 = vpop.f32.mrf.mxu0
        %v1024 = vadd.f32 0.0, %v1023
        %v1025 = vpop.f32.mrf.mxu0
        %v1026 = vadd.f32 0.0, %v1025
        %1027 = vmatmul.bf16.gmra.mxu0 %v987
        %v1028 = vpop.f32.mrf.mxu0
        %v1029 = vadd.f32 0.0, %v1028
        %v1030 = vpop.f32.mrf.mxu0
        %v1031 = vadd.f32 0.0, %v1030
        %1032 = vmatmul.bf16.gmra.mxu0 %v989
        %v1033 = vpop.f32.mrf.mxu0
        %v1034 = vadd.f32 0.0, %v1033
        %v1035 = vpop.f32.mrf.mxu0
        %v1036 = vadd.f32 0.0, %v1035
        %1037 = vmatmul.bf16.gmra.mxu0 %v991
        %v1038 = vpop.f32.mrf.mxu0
        %v1039 = vadd.f32 0.0, %v1038
        %v1040 = vpop.f32.mrf.mxu0
        %v1041 = vadd.f32 0.0, %v1040
        %1042 = vmatmul.bf16.gmra.mxu0 %v993
        %v1043 = vpop.f32.mrf.mxu0
        %v1044 = vadd.f32 0.0, %v1043
        %v1045 = vpop.f32.mrf.mxu0
        %v1046 = vadd.f32 0.0, %v1045
        %1047 = vdwg.mxu0
        %v1050 = vunpack.c.l.b16 %v943
        %v1051 = vunpack.c.l.b16 %v944
        %v1052 = vpack.c.b16 %v1051, %v1050
        %v1053 = vsel %vm978, %v928, 0
        %v1056 = vsel %vm995, %v1052, 0
        %1058 = vmatpush.bf16.msra.mxu0 0
        %1059 = vmatpush.bf16.msra.mxu0 0
        %1060 = vmatpush.bf16.msra.mxu0 0
        %1061 = vmatpush.bf16.msra.mxu0 0
        %1062 = vmatpush.bf16.msra.mxu0 0
        %1063 = vmatpush.bf16.msra.mxu0 0
        %1064 = vmatpush.bf16.msra.mxu0 0
        %1065 = vmatpush.bf16.msra.mxu0 %v1056
        %1066 = vmatmul.bf16.gmra.mxu0 %v1053
        %v1067 = vpop.f32.mrf.mxu0
        %v1068 = vadd.f32 %v1009, %v1067
        %v1069 = vpop.f32.mrf.mxu0
        %v1070 = vadd.f32 %v1011, %v1069
        %1071 = vmatmul.bf16.gmra.mxu0 %v979
        %v1072 = vpop.f32.mrf.mxu0
        %v1073 = vadd.f32 %v1014, %v1072
        %v1074 = vpop.f32.mrf.mxu0
        %v1075 = vadd.f32 %v1016, %v1074
        %1076 = vmatmul.bf16.gmra.mxu0 %v981
        %v1077 = vpop.f32.mrf.mxu0
        %v1078 = vadd.f32 %v1019, %v1077
        %v1079 = vpop.f32.mrf.mxu0
        %v1080 = vadd.f32 %v1021, %v1079
        %1081 = vmatmul.bf16.gmra.mxu0 %v983
        %v1082 = vpop.f32.mrf.mxu0
        %v1083 = vadd.f32 %v1024, %v1082
        %v1084 = vpop.f32.mrf.mxu0
        %v1085 = vadd.f32 %v1026, %v1084
        %1086 = vmatmul.bf16.gmra.mxu0 %v985
        %v1087 = vpop.f32.mrf.mxu0
        %v1088 = vadd.f32 %v1029, %v1087
        %v1089 = vpop.f32.mrf.mxu0
        %v1090 = vadd.f32 %v1031, %v1089
        %1091 = vmatmul.bf16.gmra.mxu0 %v987
        %v1092 = vpop.f32.mrf.mxu0
        %v1093 = vadd.f32 %v1034, %v1092
        %v1094 = vpop.f32.mrf.mxu0
        %v1095 = vadd.f32 %v1036, %v1094
        %1096 = vmatmul.bf16.gmra.mxu0 %v989
        %v1097 = vpop.f32.mrf.mxu0
        %v1098 = vadd.f32 %v1039, %v1097
        %v1099 = vpop.f32.mrf.mxu0
        %v1100 = vadd.f32 %v1041, %v1099
        %1101 = vmatmul.bf16.gmra.mxu0 %v991
        %v1102 = vpop.f32.mrf.mxu0
        %v1103 = vadd.f32 %v1044, %v1102
        %v1104 = vpop.f32.mrf.mxu0
        %v1105 = vadd.f32 %v1046, %v1104
        %1106 = vdwg.mxu0
        %v1108 = vshrl.u32 %v728, 16
        %v1110 = vshll.u32 %v728, 16
        %v1112 = vrot.slane %v1110, 1
        %v1113 = vor.u32 %v1108, %v1112
        %v1115 = vshll.u32 %v738, 16
        %v1117 = vrot.slane %v1115, 1
        %v1118 = vsel %vm739, %v1113, %v1117
        %1119 = vrot.lane.b32.xlu0 %v1118, 4
        %v1120 = vpop.permute.xlu0 %1119
        %v1123 = vrot.slane %v728, 1
        %v1124 = vrot.slane %v738, 1
        %v1125 = vsel %vm868, %v1123, %v1124
        %1126 = vrot.lane.b32.xlu0 %v1125, 8
        %v1127 = vpop.permute.xlu0 %1126
        %v1129 = vsel %vm909, %v728, %v1120
        %v1131 = vsel %vm926, %v1129, %v1127
        %v1132 = vld [vmem:[%s3 + $0xc] sm:$0xf]
        %v1133 = vld [vmem:[%s3 + $0x10] sm:$0x3]
        %v1136 = vunpack.c.l.b16 %v1132
        %v1137 = vunpack.c.l.b16 %v1133
        %v1138 = vpack.c.b16 %v1137, %v1136
        %v1139 = vsel %vm978, %v1131, 0
        %v1142 = vsel %vm995, %v1138, 0
        %1144 = vmatpush.bf16.msra.mxu0 0
        %1145 = vmatpush.bf16.msra.mxu0 0
        %1146 = vmatpush.bf16.msra.mxu0 0
        %1147 = vmatpush.bf16.msra.mxu0 0
        %1148 = vmatpush.bf16.msra.mxu0 0
        %1149 = vmatpush.bf16.msra.mxu0 0
        %1150 = vmatpush.bf16.msra.mxu0 0
        %1151 = vmatpush.bf16.msra.mxu0 %v1142
        %1152 = vmatmul.bf16.gmra.mxu0 %v981
        %v1153 = vpop.f32.mrf.mxu0
        %v1154 = vadd.f32 0.0, %v1153
        %v1155 = vpop.f32.mrf.mxu0
        %v1156 = vadd.f32 0.0, %v1155
        %1157 = vmatmul.bf16.gmra.mxu0 %v983
        %v1158 = vpop.f32.mrf.mxu0
        %v1159 = vadd.f32 0.0, %v1158
        %v1160 = vpop.f32.mrf.mxu0
        %v1161 = vadd.f32 0.0, %v1160
        %1162 = vmatmul.bf16.gmra.mxu0 %v985
        %v1163 = vpop.f32.mrf.mxu0
        %v1164 = vadd.f32 0.0, %v1163
        %v1165 = vpop.f32.mrf.mxu0
        %v1166 = vadd.f32 0.0, %v1165
        %1167 = vmatmul.bf16.gmra.mxu0 %v987
        %v1168 = vpop.f32.mrf.mxu0
        %v1169 = vadd.f32 0.0, %v1168
        %v1170 = vpop.f32.mrf.mxu0
        %v1171 = vadd.f32 0.0, %v1170
        %1172 = vmatmul.bf16.gmra.mxu0 %v989
        %v1173 = vpop.f32.mrf.mxu0
        %v1174 = vadd.f32 0.0, %v1173
        %v1175 = vpop.f32.mrf.mxu0
        %v1176 = vadd.f32 0.0, %v1175
        %1177 = vmatmul.bf16.gmra.mxu0 %v991
        %v1178 = vpop.f32.mrf.mxu0
        %v1179 = vadd.f32 0.0, %v1178
        %v1180 = vpop.f32.mrf.mxu0
        %v1181 = vadd.f32 0.0, %v1180
        %1182 = vmatmul.bf16.gmra.mxu0 %v993
        %v1183 = vpop.f32.mrf.mxu0
        %v1184 = vadd.f32 0.0, %v1183
        %v1185 = vpop.f32.mrf.mxu0
        %v1186 = vadd.f32 0.0, %v1185
        %1187 = vmatmul.bf16.gmra.mxu0 %v1139
        %v1188 = vpop.f32.mrf.mxu0
        %v1189 = vadd.f32 0.0, %v1188
        %v1190 = vpop.f32.mrf.mxu0
        %v1191 = vadd.f32 0.0, %v1190
        %1192 = vdwg.mxu0
        %v1193 = vadd.f32 %v1068, %v1154
        %v1194 = vadd.f32 %v1070, %v1156
        %v1195 = vadd.f32 %v1073, %v1159
        %v1196 = vadd.f32 %v1075, %v1161
        %v1197 = vadd.f32 %v1078, %v1164
        %v1198 = vadd.f32 %v1080, %v1166
        %v1199 = vadd.f32 %v1083, %v1169
        %v1200 = vadd.f32 %v1085, %v1171
        %v1201 = vadd.f32 %v1088, %v1174
        %v1202 = vadd.f32 %v1090, %v1176
        %v1203 = vadd.f32 %v1093, %v1179
        %v1204 = vadd.f32 %v1095, %v1181
        %v1205 = vadd.f32 %v1098, %v1184
        %v1206 = vadd.f32 %v1100, %v1186
        %v1207 = vadd.f32 %v1103, %v1189
        %v1208 = vadd.f32 %v1105, %v1191
        %v1209 = vld [vmem:[%s4] sm:$0x1]
        %v1211 = vperm.slane %v1209, 0
        %v1213 = vadd.f32 %v1193, %v1211
        %v1214 = vadd.f32 %v1194, %v1211
        %v1215 = vadd.f32 %v1195, %v1211
        %v1216 = vadd.f32 %v1196, %v1211
        %v1217 = vadd.f32 %v1197, %v1211
        %v1218 = vadd.f32 %v1198, %v1211
        %v1219 = vadd.f32 %v1199, %v1211
        %v1220 = vadd.f32 %v1200, %v1211
        %v1221 = vadd.f32 %v1201, %v1211
        %v1222 = vadd.f32 %v1202, %v1211
        %v1223 = vadd.f32 %v1203, %v1211
        %v1224 = vadd.f32 %v1204, %v1211
        %v1225 = vadd.f32 %v1205, %v1211
        %v1226 = vadd.f32 %v1206, %v1211
        %v1227 = vadd.f32 %v1207, %v1211
        %v1228 = vadd.f32 %v1208, %v1211
        %v1229 = vmax.f32 %v1213, 0.0
        %v1230 = vmax.f32 %v1214, 0.0
        %v1231 = vmax.f32 %v1215, 0.0
        %v1232 = vmax.f32 %v1216, 0.0
        %v1233 = vmax.f32 %v1217, 0.0
        %v1234 = vmax.f32 %v1218, 0.0
        %v1235 = vmax.f32 %v1219, 0.0
        %v1236 = vmax.f32 %v1220, 0.0
        %v1237 = vmax.f32 %v1221, 0.0
        %v1238 = vmax.f32 %v1222, 0.0
        %v1239 = vmax.f32 %v1223, 0.0
        %v1240 = vmax.f32 %v1224, 0.0
        %v1241 = vmax.f32 %v1225, 0.0
        %v1242 = vmax.f32 %v1226, 0.0
        %v1243 = vmax.f32 %v1227, 0.0
        %v1244 = vmax.f32 %v1228, 0.0
        %v1245 = vpack.c.bf16 %v1230, %v1229
        %v1246 = vpack.c.bf16 %v1232, %v1231
        %v1247 = vpack.c.bf16 %v1234, %v1233
        %v1248 = vpack.c.bf16 %v1236, %v1235
        %v1249 = vpack.c.bf16 %v1238, %v1237
        %v1250 = vpack.c.bf16 %v1240, %v1239
        %v1251 = vpack.c.bf16 %v1242, %v1241
        %v1252 = vpack.c.bf16 %v1244, %v1243
        %v1253 = vld [vmem:[%s5] sm:$0x3]
        %v1254 = vld [vmem:[%s6] sm:$0x1]
        %v1256 = vperm.slane %v1254, 0
        %v1259 = vsel %vm909, %v1245, 0
        %v1262 = vsel %vm909, %v1246, 0
        %v1265 = vsel %vm909, %v1247, 0
        %v1268 = vsel %vm909, %v1248, 0
        %v1271 = vsel %vm909, %v1249, 0
        %v1274 = vsel %vm909, %v1250, 0
        %v1277 = vsel %vm909, %v1251, 0
        %v1280 = vsel %vm909, %v1252, 0
        %vm1282 = vcmask 1041408
        %v1284 = vsel %vm1282, %v1253, 0
        %1286 = vmatpush.bf16.msra.mxu0 0
        %1287 = vmatpush.bf16.msra.mxu0 0
        %1288 = vmatpush.bf16.msra.mxu0 0
        %1289 = vmatpush.bf16.msra.mxu0 0
        %1290 = vmatpush.bf16.msra.mxu0 0
        %1291 = vmatpush.bf16.msra.mxu0 0
        %1292 = vmatpush.bf16.msra.mxu0 0
        %1293 = vmatpush.bf16.msra.mxu0 %v1284
        %1294 = vmatmul.bf16.gmra.mxu0 %v1259
        %v1295 = vpop.f32.mrf.mxu0
        %v1296 = vadd.f32 %v1256, %v1295
        %v1297 = vpop.f32.mrf.mxu0
        %v1298 = vadd.f32 %v1256, %v1297
        %1299 = vmatmul.bf16.gmra.mxu0 %v1262
        %v1300 = vpop.f32.mrf.mxu0
        %v1301 = vadd.f32 %v1256, %v1300
        %v1302 = vpop.f32.mrf.mxu0
        %v1303 = vadd.f32 %v1256, %v1302
        %1304 = vmatmul.bf16.gmra.mxu0 %v1265
        %v1305 = vpop.f32.mrf.mxu0
        %v1306 = vadd.f32 %v1256, %v1305
        %v1307 = vpop.f32.mrf.mxu0
        %v1308 = vadd.f32 %v1256, %v1307
        %1309 = vmatmul.bf16.gmra.mxu0 %v1268
        %v1310 = vpop.f32.mrf.mxu0
        %v1311 = vadd.f32 %v1256, %v1310
        %v1312 = vpop.f32.mrf.mxu0
        %v1313 = vadd.f32 %v1256, %v1312
        %1314 = vmatmul.bf16.gmra.mxu0 %v1271
        %v1315 = vpop.f32.mrf.mxu0
        %v1316 = vadd.f32 %v1256, %v1315
        %v1317 = vpop.f32.mrf.mxu0
        %v1318 = vadd.f32 %v1256, %v1317
        %1319 = vmatmul.bf16.gmra.mxu0 %v1274
        %v1320 = vpop.f32.mrf.mxu0
        %v1321 = vadd.f32 %v1256, %v1320
        %v1322 = vpop.f32.mrf.mxu0
        %v1323 = vadd.f32 %v1256, %v1322
        %1324 = vmatmul.bf16.gmra.mxu0 %v1277
        %v1325 = vpop.f32.mrf.mxu0
        %v1326 = vadd.f32 %v1256, %v1325
        %v1327 = vpop.f32.mrf.mxu0
        %v1328 = vadd.f32 %v1256, %v1327
        %1329 = vmatmul.bf16.gmra.mxu0 %v1280
        %v1330 = vpop.f32.mrf.mxu0
        %v1331 = vadd.f32 %v1256, %v1330
        %v1332 = vpop.f32.mrf.mxu0
        %v1333 = vadd.f32 %v1256, %v1332
        %1334 = vdwg.mxu0
        %v1335 = vunpack.c.l.bf16 %v319
        %v1336 = vunpack.c.l.bf16 %v320
        %v1337 = vunpack.c.l.bf16 %v321
        %v1338 = vunpack.c.l.bf16 %v322
        %v1339 = vunpack.c.l.bf16 %v323
        %v1340 = vunpack.c.l.bf16 %v324
        %v1341 = vunpack.c.l.bf16 %v325
        %v1342 = vunpack.c.l.bf16 %v326
        %v1343 = vunpack.c.l.bf16 %v327
        %v1344 = vunpack.c.l.bf16 %v328
        %v1345 = vunpack.c.l.bf16 %v329
        %v1346 = vunpack.c.l.bf16 %v330
        %v1347 = vunpack.c.l.bf16 %v331
        %v1348 = vunpack.c.l.bf16 %v332
        %v1349 = vunpack.c.l.bf16 %v333
        %v1350 = vunpack.c.l.bf16 %v334
        %v1351 = vadd.f32 %v1296, %v1335
        %v1352 = vadd.f32 %v1298, %v1336
        %v1353 = vadd.f32 %v1301, %v1337
        %v1354 = vadd.f32 %v1303, %v1338
        %v1355 = vadd.f32 %v1306, %v1339
        %v1356 = vadd.f32 %v1308, %v1340
        %v1357 = vadd.f32 %v1311, %v1341
        %v1358 = vadd.f32 %v1313, %v1342
        %v1359 = vadd.f32 %v1316, %v1343
        %v1360 = vadd.f32 %v1318, %v1344
        %v1361 = vadd.f32 %v1321, %v1345
        %v1362 = vadd.f32 %v1323, %v1346
        %v1363 = vadd.f32 %v1326, %v1347
        %v1364 = vadd.f32 %v1328, %v1348
        %v1365 = vadd.f32 %v1331, %v1349
        %v1366 = vadd.f32 %v1333, %v1350
        %v1367 = vmax.f32 %v1351, 0.0
        %v1368 = vmax.f32 %v1352, 0.0
        %v1369 = vmax.f32 %v1353, 0.0
        %v1370 = vmax.f32 %v1354, 0.0
        %v1371 = vmax.f32 %v1355, 0.0
        %v1372 = vmax.f32 %v1356, 0.0
        %v1373 = vmax.f32 %v1357, 0.0
        %v1374 = vmax.f32 %v1358, 0.0
        %v1375 = vmax.f32 %v1359, 0.0
        %v1376 = vmax.f32 %v1360, 0.0
        %v1377 = vmax.f32 %v1361, 0.0
        %v1378 = vmax.f32 %v1362, 0.0
        %v1379 = vmax.f32 %v1363, 0.0
        %v1380 = vmax.f32 %v1364, 0.0
        %v1381 = vmax.f32 %v1365, 0.0
        %v1382 = vmax.f32 %v1366, 0.0
        %v1383 = vpack.c.bf16 %v1367, %v1367
        %v1384 = vpack.c.bf16 %v1368, %v1368
        %v1385 = vpack.c.bf16 %v1369, %v1369
        %v1386 = vpack.c.bf16 %v1370, %v1370
        %v1387 = vpack.c.bf16 %v1371, %v1371
        %v1388 = vpack.c.bf16 %v1372, %v1372
        %v1389 = vpack.c.bf16 %v1373, %v1373
        %v1390 = vpack.c.bf16 %v1374, %v1374
        %v1391 = vpack.c.bf16 %v1375, %v1375
        %v1392 = vpack.c.bf16 %v1376, %v1376
        %v1393 = vpack.c.bf16 %v1377, %v1377
        %v1394 = vpack.c.bf16 %v1378, %v1378
        %v1395 = vpack.c.bf16 %v1379, %v1379
        %v1396 = vpack.c.bf16 %v1380, %v1380
        %v1397 = vpack.c.bf16 %v1381, %v1381
        %v1398 = vpack.c.bf16 %v1382, %v1382
        %vm1399 = vcmask 125952
        %1400 = vst.msk [vmem:[%s312] sm:$0xf] %vm1399, %v1383
        %1401 = vst.msk [vmem:[%s312 + $0x4] sm:$0xf] %vm1399, %v1384
        %1402 = vst.msk [vmem:[%s312 + $0x8] sm:$0xf] %vm1399, %v1385
        %1403 = vst.msk [vmem:[%s312 + $0xc] sm:$0xf] %vm1399, %v1386
        %1404 = vst.msk [vmem:[%s312 + $0x10] sm:$0xf] %vm1399, %v1387
        %1405 = vst.msk [vmem:[%s312 + $0x14] sm:$0xf] %vm1399, %v1388
        %1406 = vst.msk [vmem:[%s312 + $0x18] sm:$0xf] %vm1399, %v1389
        %1407 = vst.msk [vmem:[%s312 + $0x1c] sm:$0xf] %vm1399, %v1390
        %1408 = vst.msk [vmem:[%s312 + $0x20] sm:$0xf] %vm1399, %v1391
        %1409 = vst.msk [vmem:[%s312 + $0x24] sm:$0xf] %vm1399, %v1392
        %1410 = vst.msk [vmem:[%s312 + $0x28] sm:$0xf] %vm1399, %v1393
        %1411 = vst.msk [vmem:[%s312 + $0x2c] sm:$0xf] %vm1399, %v1394
        %1412 = vst.msk [vmem:[%s312 + $0x30] sm:$0xf] %vm1399, %v1395
        %1413 = vst.msk [vmem:[%s312 + $0x34] sm:$0xf] %vm1399, %v1396
        %1414 = vst.msk [vmem:[%s312 + $0x38] sm:$0xf] %vm1399, %v1397
        %1415 = vst.msk [vmem:[%s312 + $0x3c] sm:$0xf] %vm1399, %v1398
        %s1416 = sand.u32 %s198, 1
        %s1417 = scalar_lea.sflag [#allocation4], %s1416
        %s1418 = sand.u32 %s198, 1
        %s1419 = smul.addr %s1418, 64
        %s1420 = scalar_lea.vmem [#allocation5], %s1419
        // Predicated region
        $region53: #{tpu_custom_call.1} parent=47 // pred_check
          %p1421 = pneg %p208
        $region54: #{tpu_custom_call.1} parent=47 // pred_check_branch
          %1423 = sbr.rel (%p1421) target = $region56
        $region55: #{tpu_custom_call.1} parent=47 // pred_region
          %s1424 = smul.u32 8, %s29
          %1426 = vsyncadd %s1417, 0
          %s1427 = smul.addr %s1424, 2
          %s1428 = smul.addr %s28, 32
          %s1429 = sadd.s32 %s1427, %s1428
          %s1430 = smul.addr %s1429, 4
          %s1431 = scalar_lea.hbm %s7, %s1430
          %s1432 = sshll.u32 %s1420, 4
          %s1433 = int_to_ptr.vmem [resolvable:$true] %s1432
          %s1434 = sshll.u32 %s1431, 4
          %s1435 = int_to_ptr.hbm [resolvable:$true] %s1434
          %1440 = dma.vmem_to_hbm [thread:$0]  %s1433, 1024, %s1435, %s1417, 64, 64, 4
        $region56: #{tpu_custom_call.1} parent=47 // pred_fallthru
          _
      $region48: #{tpu_custom_call.1} parent=5 // pred_fallthru
        _
      %p1441 = scmp.le.s32.totalorder 2, %s19
      // Predicated region
      $region57: #{tpu_custom_call.1} parent=5 // pred_check
        %p1442 = pneg %p1441
      $region58: #{tpu_custom_call.1} parent=5 // pred_check_branch
        %1444 = sbr.rel (%p1442) target = $region60
      $region59: #{tpu_custom_call.1} parent=5 // pred_region
        %s1445 = ssub.s32 %s19, 2
        // Predicated region
        $region61: #{tpu_custom_call.1} parent=59 // pred_check
          %p1446 = pneg %p214
        $region62: #{tpu_custom_call.1} parent=59 // pred_check_branch
          %1448 = sbr.rel (%p1446) target = $region64
        $region63: #{tpu_custom_call.1} parent=59 // pred_region
          %s1449 = sand.u32 %s199, 1
          %s1450 = scalar_lea.sflag [#allocation4], %s1449
          %s1451 = sand.u32 %s199, 1
          %s1452 = smul.addr %s1451, 64
          %s1453 = scalar_lea.vmem [#allocation5], %s1452
          %1455 = dma.done %s1450, 1024
        $region64: #{tpu_custom_call.1} parent=59 // pred_fallthru
          _
      $region60: #{tpu_custom_call.1} parent=5 // pred_fallthru
        _
    $region6: #{tpu_custom_call.1} parent=1 // loop_footer
      %s23 = sadd.s32 1, %s19
    $region7: #{tpu_custom_call.1} parent=1 // loop_footer_branch
      %18 = sbr.rel target = $region3
    $region8: #{tpu_custom_call.1} parent=1 // loop_exit
      _
    %1456 = vsyncpa [#allocation3], 1
    %s1457 = scalar_lea.sflag [#allocation3], 1
    %1458 = vsyncpa %s1457, 1
    %1459 = vsyncpa [#allocation4], 1
    %s1460 = scalar_lea.sflag [#allocation4], 1
    %1461 = vsyncpa %s1460, 1

</llo_original>
